<compile_context>
chip_gen: v5e
topology: v5e:2x2
jax: 0.10.0
libtpu: 0.0.40
codegen_flags: <defaults>
</compile_context>

<pallas_src>
from functools import partial

import jax
import jax.numpy as jnp
import numpy as np
from jax import lax
from jax.experimental import pallas as pl
from jax.experimental.pallas import tpu as pltpu


def _sigmoid(x):
    # sigmoid(x) == 0.5 * (1 + tanh(x/2)); one EUP tanh + VPU mul/add,
    # avoiding an exp + reciprocal chain on the serial critical path.
    return 0.5 * jnp.tanh(0.5 * x) + 0.5


def _lstm_kernel(x_ref, wih_ref, whh_ref, b_ref, out_ref,
                 gx_ref, h_ref, c_ref, *, chunk_steps, batch_chunk, hidden_p):
    """One (batch-chunk, time-chunk) grid step of the LSTM.

    x_ref  : (Tc*Bc, E)    time-major rows for this chunk (row = s*Bc + b)
    wih_ref: (E, 4Hp)      input->gates weight (pre-transposed, gate-permuted)
    whh_ref: (Hp, 4Hp)     hidden->gates weight (pre-transposed, gate-permuted)
    b_ref  : (1, 4Hp)      combined bias (b_ih + b_hh), gate-permuted
    out_ref: (Tc*Bc, Hp)   hidden-state outputs for this chunk
    gx_ref : (Tc*Bc, 4Hp)  VMEM scratch: hoisted input projection (f32)
    h_ref  : (Bc, Hp)      VMEM scratch: hidden state carried across chunks
    c_ref  : (Bc, Hp)      VMEM scratch: cell state carried across chunks
    """
    Bc = batch_chunk
    Hp = hidden_p

    # Reset recurrent state at the first time chunk of each batch chunk.
    @pl.when(pl.program_id(1) == 0)
    def _():
        h_ref[...] = jnp.zeros_like(h_ref)
        c_ref[...] = jnp.zeros_like(c_ref)

    # Hoisted input projection: one big MXU matmul for the whole time chunk.
    # TODO(synk): gx could be held in bf16 to halve the biggest VMEM slab on v7x.
    gx_ref[...] = (
        jnp.dot(x_ref[...], wih_ref[...], preferred_element_type=jnp.float32)
        + b_ref[...]
    )

    def step(s, carry):
        h_prev, c_prev = carry                                 # (Bc, Hp) f32
        row = pl.multiple_of(s * Bc, 8)                        # Bc % 8 == 0
        gates = gx_ref[pl.ds(row, Bc), :] + jnp.dot(
            h_prev.astype(whh_ref.dtype), whh_ref[...],
            preferred_element_type=jnp.float32,
        )                                                      # (Bc, 4Hp)

        # Gate order permuted to (i, f, o, g) in the wrapper: one contiguous
        # sigmoid slab + one tanh slab (lane-aligned since Hp % 128 == 0).
        ifo = _sigmoid(gates[:, :3 * Hp])
        g_g = jnp.tanh(gates[:, 3 * Hp:])
        i_g = ifo[:, 0 * Hp:1 * Hp]
        f_g = ifo[:, 1 * Hp:2 * Hp]
        o_g = ifo[:, 2 * Hp:3 * Hp]

        c_new = f_g * c_prev + i_g * g_g
        h_new = o_g * jnp.tanh(c_new)

        out_ref[pl.ds(row, Bc), :] = h_new.astype(out_ref.dtype)
        return (h_new, c_new)

    h_fin, c_fin = lax.fori_loop(
        0, chunk_steps, step, (h_ref[...], c_ref[...]),
        unroll=min(4, chunk_steps) if chunk_steps > 1 else 1,
    )
    h_ref[...] = h_fin
    c_ref[...] = c_fin


def _prep_weights(w_ih, w_hh, b_ih, b_hh, H, Hp, matmul_dtype):
    """Transpose, gate-permute (i,f,g,o)->(i,f,o,g) and pad H->Hp."""
    E = w_ih.shape[1]
    perm = jnp.array([0, 1, 3, 2])
    pad_h = Hp - H

    wih_g = w_ih.reshape(4, H, E)[perm]                           # (4, H, E)
    wih_g = jnp.pad(wih_g, ((0, 0), (0, pad_h), (0, 0)))          # (4, Hp, E)
    wih_t = jnp.transpose(wih_g, (2, 0, 1)).reshape(E, 4 * Hp)    # (E, 4Hp)

    whh_g = w_hh.reshape(4, H, H)[perm]                           # (4, H, H)
    whh_g = jnp.pad(whh_g, ((0, 0), (0, pad_h), (0, pad_h)))      # (4, Hp, Hp)
    whh_t = jnp.transpose(whh_g, (2, 0, 1)).reshape(Hp, 4 * Hp)   # (Hp, 4Hp)

    bias = (b_ih + b_hh).reshape(4, H)[perm]
    bias = jnp.pad(bias, ((0, 0), (0, pad_h)))
    bias = bias.reshape(1, 4 * Hp).astype(jnp.float32)

    if matmul_dtype is not None:
        wih_t = wih_t.astype(matmul_dtype)
        whh_t = whh_t.astype(matmul_dtype)
    return wih_t, whh_t, bias


def lstm_pallas(x_btE, w_ih, w_hh, b_ih, b_hh, *,
                matmul_dtype=jnp.bfloat16, time_chunk=None, batch_chunks=1):
    """Single-layer, batch_first LSTM (zero initial state) via Pallas.

    x_btE : (B, T, E) float32
    w_ih  : (4H, E)   PyTorch weight_ih_l0   (gate order i, f, g, o)
    w_hh  : (4H, H)   PyTorch weight_hh_l0
    b_ih  : (4H,)     PyTorch bias_ih_l0
    b_hh  : (4H,)     PyTorch bias_hh_l0
    matmul_dtype : MXU operand dtype (bf16 default; None => strict f32)
    time_chunk   : timesteps per grid step (defaults to min(T, 32))
    batch_chunks : grid batch chunks (set 2 on v7x to use both TensorCores)
    returns (B, T, H) float32
    """
    B, T, E = x_btE.shape
    H = w_hh.shape[1]
    Hp = max(128, ((H + 127) // 128) * 128)          # lane-dense hidden width

    nb = max(1, int(batch_chunks))
    Bc = ((-(-B // nb)) + 7) // 8 * 8                # per-chunk batch, %8 == 0
    Bp = nb * Bc

    Tc = int(time_chunk) if time_chunk is not None else min(T, 32)
    Tc = max(1, min(Tc, T))
    Tp = -(-T // Tc) * Tc                            # pad T to multiple of Tc
    nt = Tp // Tc

    # ---- Layout prep (host-side; cheap at these sizes). ----------------------
    # TODO(synk): at production sizes fuse this transpose/pad into the producer
    # op instead of a separate HBM round trip.
    x = x_btE
    if Bp != B or Tp != T:
        x = jnp.pad(x, ((0, Bp - B), (0, Tp - T), (0, 0)))
    # (Bp, Tp, E) -> (nb, Tp*Bc, E), time-major rows within each batch chunk.
    x = x.reshape(nb, Bc, Tp, E).transpose(0, 2, 1, 3).reshape(nb, Tp * Bc, E)
    if matmul_dtype is not None:
        x = x.astype(matmul_dtype)

    wih_t, whh_t, bias = _prep_weights(w_ih, w_hh, b_ih, b_hh, H, Hp, matmul_dtype)

    # ---- Explicit VMEM budget (chunk-bounded; re-derived per shape). ---------
    isz = jnp.dtype(matmul_dtype).itemsize if matmul_dtype is not None else 4
    bytes_needed = (
        2 * Tc * Bc * E * isz                        # x chunk, double-buffered
        + 2 * Tc * Bc * Hp * 4                       # out chunk, double-buffered
        + (E * 4 * Hp + Hp * 4 * Hp) * isz + 4 * Hp * 4   # weights + bias
        + Tc * Bc * 4 * Hp * 4                       # gx scratch (f32)
        + 2 * Bc * Hp * 4                            # h, c state
    )
    vmem_limit = int(min(100 * 1024 * 1024, max(2 * bytes_needed, 8 * 1024 * 1024)))

    out_flat = pl.pallas_call(
        partial(_lstm_kernel, chunk_steps=Tc, batch_chunk=Bc, hidden_p=Hp),
        out_shape=jax.ShapeDtypeStruct((nb, Tp * Bc, Hp), jnp.float32),
        grid_spec=pltpu.PrefetchScalarGridSpec(
            num_scalar_prefetch=0,
            grid=(nb, nt),
            in_specs=[
                pl.BlockSpec((None, Tc * Bc, E), lambda bi, ti: (bi, ti, 0)),
                pl.BlockSpec((E, 4 * Hp), lambda bi, ti: (0, 0)),
                pl.BlockSpec((Hp, 4 * Hp), lambda bi, ti: (0, 0)),
                pl.BlockSpec((1, 4 * Hp), lambda bi, ti: (0, 0)),
            ],
            out_specs=pl.BlockSpec((None, Tc * Bc, Hp), lambda bi, ti: (bi, ti, 0)),
            scratch_shapes=[
                pltpu.VMEM((Tc * Bc, 4 * Hp), jnp.float32),   # hoisted gates_x
                pltpu.VMEM((Bc, Hp), jnp.float32),            # h state (persists)
                pltpu.VMEM((Bc, Hp), jnp.float32),            # c state (persists)
            ],
        ),
        compiler_params=pltpu.CompilerParams(
            dimension_semantics=("parallel", "arbitrary"),
            vmem_limit_bytes=vmem_limit,
        ),
    )(x, wih_t, whh_t, bias)

    # Undo padding / layout: (nb, Tp*Bc, Hp) -> (B, T, H).
    out = out_flat.reshape(nb, Tp, Bc, Hp).transpose(0, 2, 1, 3)
    out = out.reshape(Bp, Tp, Hp)[:B, :T, :H]
    return out


def decoder_forward(cases, questions, params, **kwargs):
    """Decoder.forward: LSTM(cat([cases, questions], dim=1))[0]."""
    x = jnp.concatenate([cases, questions], axis=1)      # (B, Tc+Tq, E)
    return lstm_pallas(x, *params, **kwargs)


def _lstm_reference(x_btE, w_ih, w_hh, b_ih, b_hh):
    """Pure-JAX reference with PyTorch LSTM semantics."""
    B, T, E = x_btE.shape
    H = w_hh.shape[1]
    bias = b_ih + b_hh

    def step(carry, x_t):
        h, c = carry
        gates = x_t @ w_ih.T + h @ w_hh.T + bias
        i = jax.nn.sigmoid(gates[:, 0 * H:1 * H])
        f = jax.nn.sigmoid(gates[:, 1 * H:2 * H])
        g = jnp.tanh(gates[:, 2 * H:3 * H])
        o = jax.nn.sigmoid(gates[:, 3 * H:4 * H])
        c = f * c + i * g
        h = o * jnp.tanh(c)
        return (h, c), h

    init = (jnp.zeros((B, H), jnp.float32), jnp.zeros((B, H), jnp.float32))
    _, hs = lax.scan(step, init, jnp.transpose(x_btE, (1, 0, 2)))
    return jnp.transpose(hs, (1, 0, 2))


if __name__ == "__main__":
    embedding_dim = 16
    hidden_dim = 32
    bsz = 2
    case_len = 4
    question_len = 4

    key = jax.random.PRNGKey(0)
    k_c, k_q, k_wih, k_whh, k_bih, k_bhh = jax.random.split(key, 6)

    cases = jax.random.normal(k_c, (bsz, case_len, embedding_dim), jnp.float32)
    questions = jax.random.normal(k_q, (bsz, question_len, embedding_dim), jnp.float32)

    bound = 1.0 / np.sqrt(hidden_dim)
    w_ih = jax.random.uniform(k_wih, (4 * hidden_dim, embedding_dim), jnp.float32, -bound, bound)
    w_hh = jax.random.uniform(k_whh, (4 * hidden_dim, hidden_dim), jnp.float32, -bound, bound)
    b_ih = jax.random.uniform(k_bih, (4 * hidden_dim,), jnp.float32, -bound, bound)
    b_hh = jax.random.uniform(k_bhh, (4 * hidden_dim,), jnp.float32, -bound, bound)
    params = (w_ih, w_hh, b_ih, b_hh)

    x_cat = jnp.concatenate([cases, questions], axis=1)
    ref = jax.block_until_ready(_lstm_reference(x_cat, *params))

    # 1) Strict f32 validation (time_chunk=4 exercises cross-chunk state carry).
    out_f32 = decoder_forward(cases, questions, params,
                              matmul_dtype=None, time_chunk=4)
    out_f32 = jax.block_until_ready(out_f32)
    assert out_f32.shape == (bsz, case_len + question_len, hidden_dim), out_f32.shape
    np.testing.assert_allclose(np.asarray(out_f32), np.asarray(ref),
                               rtol=1e-4, atol=1e-5)

    # 2) Default bf16-MXU path, also exercising the batch-parallel grid axis.
    out_bf16 = decoder_forward(cases, questions, params,
                               time_chunk=4, batch_chunks=2)
    out_bf16 = jax.block_until_ready(out_bf16)
    assert out_bf16.shape == (bsz, case_len + question_len, hidden_dim), out_bf16.shape
    np.testing.assert_allclose(np.asarray(out_bf16), np.asarray(ref),
                               rtol=3e-2, atol=3e-2)

    print("KERNEL_OK")
</pallas_src>

<mosaic_0001>
module attributes {stable_mosaic.version = 11 : i64} {
  func.func @_lstm_kernel(%arg0: i32, %arg1: i32, %arg2: memref<1x32x16xf32, #tpu.memory_space<vmem>>, %arg3: memref<16x512xf32, #tpu.memory_space<vmem>>, %arg4: memref<128x512xf32, #tpu.memory_space<vmem>>, %arg5: memref<1x512xf32, #tpu.memory_space<vmem>>, %arg6: memref<1x32x128xf32, #tpu.memory_space<vmem>>, %arg7: memref<32x512xf32, #tpu.memory_space<vmem>>, %arg8: memref<8x128xf32, #tpu.memory_space<vmem>>, %arg9: memref<8x128xf32, #tpu.memory_space<vmem>>) attributes {dimension_semantics = [#tpu.dimension_semantics<parallel>, #tpu.dimension_semantics<arbitrary>], iteration_bounds = array<i64: 1, 2>, scalar_prefetch = 0 : i64, scratch_operands = 3 : i64, tpu.core_type = #tpu.core_type<tc>, window_params = [{transform_indices = @transform_0, window_bounds = array<i64: 1, 32, 16>}, {pipeline_mode = #tpu.pipeline_mode<synchronous>, transform_indices = @transform_1, window_bounds = array<i64: 16, 512>}, {pipeline_mode = #tpu.pipeline_mode<synchronous>, transform_indices = @transform_2, window_bounds = array<i64: 128, 512>}, {pipeline_mode = #tpu.pipeline_mode<synchronous>, transform_indices = @transform_3, window_bounds = array<i64: 1, 512>}, {transform_indices = @transform_4, window_bounds = array<i64: 1, 32, 128>}]} {
    %c0_i32 = arith.constant 0 : i32
    %0 = arith.cmpi eq, %arg1, %c0_i32 : i32
    %1 = arith.extui %0 : i1 to i32
    %c0_i32_0 = arith.constant 0 : i32
    %2 = arith.cmpi ne, %1, %c0_i32_0 : i32
    scf.if %2 {
      %cst_57 = arith.constant 0.000000e+00 : f32
      %131 = vector.broadcast %cst_57 : f32 to vector<8x128xf32>
      %c0_58 = arith.constant 0 : index
      %c0_59 = arith.constant 0 : index
      %132 = vector.load %arg8[%c0_58, %c0_59] : memref<8x128xf32, #tpu.memory_space<vmem>>, vector<8x128xf32>
      tpu.vector_store %arg8[%c0_58, %c0_59], %131 {strides = array<i32>} : memref<8x128xf32, #tpu.memory_space<vmem>>, vector<8x128xf32>,
      %cst_60 = arith.constant 0.000000e+00 : f32
      %133 = vector.broadcast %cst_60 : f32 to vector<8x128xf32>
      %c0_61 = arith.constant 0 : index
      %c0_62 = arith.constant 0 : index
      %134 = vector.load %arg9[%c0_61, %c0_62] : memref<8x128xf32, #tpu.memory_space<vmem>>, vector<8x128xf32>
      tpu.vector_store %arg9[%c0_61, %c0_62], %133 {strides = array<i32>} : memref<8x128xf32, #tpu.memory_space<vmem>>, vector<8x128xf32>,
    } else {
    }
    %c0 = arith.constant 0 : index
    %c0_1 = arith.constant 0 : index
    %c0_2 = arith.constant 0 : index
    %3 = vector.load %arg2[%c0, %c0_1, %c0_2] : memref<1x32x16xf32, #tpu.memory_space<vmem>>, vector<1x32x16xf32>
    %4 = vector.shape_cast %3 : vector<1x32x16xf32> to vector<32x16xf32>
    %c0_3 = arith.constant 0 : index
    %c0_4 = arith.constant 0 : index
    %5 = vector.load %arg3[%c0_3, %c0_4] : memref<16x512xf32, #tpu.memory_space<vmem>>, vector<16x512xf32>
    %cst = arith.constant dense<0.000000e+00> : vector<32x512xf32>
    %6 = tpu.matmul %4, %5, %cst {dimension_numbers = #tpu.dot_dimension_numbers<[1], [0], [0], [1], [0, 0, 1, 1], [], []>} : vector<32x16xf32>, vector<16x512xf32>, vector<32x512xf32> -> vector<32x512xf32>
    %c0_5 = arith.constant 0 : index
    %c0_6 = arith.constant 0 : index
    %7 = vector.load %arg5[%c0_5, %c0_6] : memref<1x512xf32, #tpu.memory_space<vmem>>, vector<1x512xf32>
    %8 = vector.broadcast %7 : vector<1x512xf32> to vector<32x512xf32>
    %9 = arith.addf %6, %8 : vector<32x512xf32>
    %c0_7 = arith.constant 0 : index
    %c0_8 = arith.constant 0 : index
    %10 = vector.load %arg7[%c0_7, %c0_8] : memref<32x512xf32, #tpu.memory_space<vmem>>, vector<32x512xf32>
    tpu.vector_store %arg7[%c0_7, %c0_8], %9 {strides = array<i32>} : memref<32x512xf32, #tpu.memory_space<vmem>>, vector<32x512xf32>,
    %c0_9 = arith.constant 0 : index
    %c0_10 = arith.constant 0 : index
    %11 = vector.load %arg8[%c0_9, %c0_10] : memref<8x128xf32, #tpu.memory_space<vmem>>, vector<8x128xf32>
    %c0_11 = arith.constant 0 : index
    %c0_12 = arith.constant 0 : index
    %12 = vector.load %arg9[%c0_11, %c0_12] : memref<8x128xf32, #tpu.memory_space<vmem>>, vector<8x128xf32>
    %c0_i32_13 = arith.constant 0 : i32
    %c8_i32 = arith.constant 8 : i32
    %13 = arith.muli %c0_i32_13, %c8_i32 : i32
    %14 = tpu.assume_multiple %13, 8 : i32
    %15 = arith.index_cast %14 : i32 to index
    %c0_14 = arith.constant 0 : index
    %16 = vector.load %arg7[%15, %c0_14] : memref<32x512xf32, #tpu.memory_space<vmem>>, vector<8x512xf32>
    %c0_15 = arith.constant 0 : index
    %c0_16 = arith.constant 0 : index
    %17 = vector.load %arg4[%c0_15, %c0_16] : memref<128x512xf32, #tpu.memory_space<vmem>>, vector<128x512xf32>
    %cst_17 = arith.constant dense<0.000000e+00> : vector<8x512xf32>
    %18 = tpu.matmul %11, %17, %cst_17 {dimension_numbers = #tpu.dot_dimension_numbers<[1], [0], [0], [1], [0, 0, 1, 1], [], []>} : vector<8x128xf32>, vector<128x512xf32>, vector<8x512xf32> -> vector<8x512xf32>
    %19 = arith.addf %16, %18 : vector<8x512xf32>
    %20 = vector.extract_strided_slice %19 {offsets = [0, 0], sizes = [8, 384], strides = [1, 1]} : vector<8x512xf32> to vector<8x384xf32>
    %cst_18 = arith.constant 5.000000e-01 : f32
    %21 = vector.broadcast %cst_18 : f32 to vector<8x384xf32>
    %22 = arith.mulf %21, %20 : vector<8x384xf32>
    %23 = math.tanh %22 : vector<8x384xf32>
    %cst_19 = arith.constant 5.000000e-01 : f32
    %24 = vector.broadcast %cst_19 : f32 to vector<8x384xf32>
    %25 = arith.mulf %24, %23 : vector<8x384xf32>
    %cst_20 = arith.constant 5.000000e-01 : f32
    %26 = vector.broadcast %cst_20 : f32 to vector<8x384xf32>
    %27 = arith.addf %25, %26 : vector<8x384xf32>
    %28 = vector.extract_strided_slice %19 {offsets = [0, 384], sizes = [8, 128], strides = [1, 1]} : vector<8x512xf32> to vector<8x128xf32>
    %29 = math.tanh %28 : vector<8x128xf32>
    %30 = vector.extract_strided_slice %27 {offsets = [0, 0], sizes = [8, 128], strides = [1, 1]} : vector<8x384xf32> to vector<8x128xf32>
    %31 = vector.extract_strided_slice %27 {offsets = [0, 128], sizes = [8, 128], strides = [1, 1]} : vector<8x384xf32> to vector<8x128xf32>
    %32 = vector.extract_strided_slice %27 {offsets = [0, 256], sizes = [8, 128], strides = [1, 1]} : vector<8x384xf32> to vector<8x128xf32>
    %33 = arith.mulf %31, %12 : vector<8x128xf32>
    %34 = arith.mulf %30, %29 : vector<8x128xf32>
    %35 = arith.addf %33, %34 : vector<8x128xf32>
    %36 = math.tanh %35 : vector<8x128xf32>
    %37 = arith.mulf %32, %36 : vector<8x128xf32>
    %c0_21 = arith.constant 0 : index
    %38 = arith.index_cast %14 : i32 to index
    %c0_22 = arith.constant 0 : index
    %39 = vector.load %arg6[%c0_21, %38, %c0_22] : memref<1x32x128xf32, #tpu.memory_space<vmem>>, vector<1x8x128xf32>
    %40 = vector.shape_cast %39 : vector<1x8x128xf32> to vector<8x128xf32>
    %41 = vector.shape_cast %37 : vector<8x128xf32> to vector<1x8x128xf32>
    tpu.vector_store %arg6[%c0_21, %38, %c0_22], %41 {strides = array<i32>} : memref<1x32x128xf32, #tpu.memory_space<vmem>>, vector<1x8x128xf32>,
    %c1_i32 = arith.constant 1 : i32
    %c8_i32_23 = arith.constant 8 : i32
    %42 = arith.muli %c1_i32, %c8_i32_23 : i32
    %43 = tpu.assume_multiple %42, 8 : i32
    %44 = arith.index_cast %43 : i32 to index
    %c0_24 = arith.constant 0 : index
    %45 = vector.load %arg7[%44, %c0_24] : memref<32x512xf32, #tpu.memory_space<vmem>>, vector<8x512xf32>
    %c0_25 = arith.constant 0 : index
    %c0_26 = arith.constant 0 : index
    %46 = vector.load %arg4[%c0_25, %c0_26] : memref<128x512xf32, #tpu.memory_space<vmem>>, vector<128x512xf32>
    %cst_27 = arith.constant dense<0.000000e+00> : vector<8x512xf32>
    %47 = tpu.matmul %37, %46, %cst_27 {dimension_numbers = #tpu.dot_dimension_numbers<[1], [0], [0], [1], [0, 0, 1, 1], [], []>} : vector<8x128xf32>, vector<128x512xf32>, vector<8x512xf32> -> vector<8x512xf32>
    %48 = arith.addf %45, %47 : vector<8x512xf32>
    %49 = vector.extract_strided_slice %48 {offsets = [0, 0], sizes = [8, 384], strides = [1, 1]} : vector<8x512xf32> to vector<8x384xf32>
    %cst_28 = arith.constant 5.000000e-01 : f32
    %50 = vector.broadcast %cst_28 : f32 to vector<8x384xf32>
    %51 = arith.mulf %50, %49 : vector<8x384xf32>
    %52 = math.tanh %51 : vector<8x384xf32>
    %cst_29 = arith.constant 5.000000e-01 : f32
    %53 = vector.broadcast %cst_29 : f32 to vector<8x384xf32>
    %54 = arith.mulf %53, %52 : vector<8x384xf32>
    %cst_30 = arith.constant 5.000000e-01 : f32
    %55 = vector.broadcast %cst_30 : f32 to vector<8x384xf32>
    %56 = arith.addf %54, %55 : vector<8x384xf32>
    %57 = vector.extract_strided_slice %48 {offsets = [0, 384], sizes = [8, 128], strides = [1, 1]} : vector<8x512xf32> to vector<8x128xf32>
    %58 = math.tanh %57 : vector<8x128xf32>
    %59 = vector.extract_strided_slice %56 {offsets = [0, 0], sizes = [8, 128], strides = [1, 1]} : vector<8x384xf32> to vector<8x128xf32>
    %60 = vector.extract_strided_slice %56 {offsets = [0, 128], sizes = [8, 128], strides = [1, 1]} : vector<8x384xf32> to vector<8x128xf32>
    %61 = vector.extract_strided_slice %56 {offsets = [0, 256], sizes = [8, 128], strides = [1, 1]} : vector<8x384xf32> to vector<8x128xf32>
    %62 = arith.mulf %60, %35 : vector<8x128xf32>
    %63 = arith.mulf %59, %58 : vector<8x128xf32>
    %64 = arith.addf %62, %63 : vector<8x128xf32>
    %65 = math.tanh %64 : vector<8x128xf32>
    %66 = arith.mulf %61, %65 : vector<8x128xf32>
    %c0_31 = arith.constant 0 : index
    %67 = arith.index_cast %43 : i32 to index
    %c0_32 = arith.constant 0 : index
    %68 = vector.load %arg6[%c0_31, %67, %c0_32] : memref<1x32x128xf32, #tpu.memory_space<vmem>>, vector<1x8x128xf32>
    %69 = vector.shape_cast %68 : vector<1x8x128xf32> to vector<8x128xf32>
    %70 = vector.shape_cast %66 : vector<8x128xf32> to vector<1x8x128xf32>
    tpu.vector_store %arg6[%c0_31, %67, %c0_32], %70 {strides = array<i32>} : memref<1x32x128xf32, #tpu.memory_space<vmem>>, vector<1x8x128xf32>,
    %c2_i32 = arith.constant 2 : i32
    %c8_i32_33 = arith.constant 8 : i32
    %71 = arith.muli %c2_i32, %c8_i32_33 : i32
    %72 = tpu.assume_multiple %71, 8 : i32
    %73 = arith.index_cast %72 : i32 to index
    %c0_34 = arith.constant 0 : index
    %74 = vector.load %arg7[%73, %c0_34] : memref<32x512xf32, #tpu.memory_space<vmem>>, vector<8x512xf32>
    %c0_35 = arith.constant 0 : index
    %c0_36 = arith.constant 0 : index
    %75 = vector.load %arg4[%c0_35, %c0_36] : memref<128x512xf32, #tpu.memory_space<vmem>>, vector<128x512xf32>
    %cst_37 = arith.constant dense<0.000000e+00> : vector<8x512xf32>
    %76 = tpu.matmul %66, %75, %cst_37 {dimension_numbers = #tpu.dot_dimension_numbers<[1], [0], [0], [1], [0, 0, 1, 1], [], []>} : vector<8x128xf32>, vector<128x512xf32>, vector<8x512xf32> -> vector<8x512xf32>
    %77 = arith.addf %74, %76 : vector<8x512xf32>
    %78 = vector.extract_strided_slice %77 {offsets = [0, 0], sizes = [8, 384], strides = [1, 1]} : vector<8x512xf32> to vector<8x384xf32>
    %cst_38 = arith.constant 5.000000e-01 : f32
    %79 = vector.broadcast %cst_38 : f32 to vector<8x384xf32>
    %80 = arith.mulf %79, %78 : vector<8x384xf32>
    %81 = math.tanh %80 : vector<8x384xf32>
    %cst_39 = arith.constant 5.000000e-01 : f32
    %82 = vector.broadcast %cst_39 : f32 to vector<8x384xf32>
    %83 = arith.mulf %82, %81 : vector<8x384xf32>
    %cst_40 = arith.constant 5.000000e-01 : f32
    %84 = vector.broadcast %cst_40 : f32 to vector<8x384xf32>
    %85 = arith.addf %83, %84 : vector<8x384xf32>
    %86 = vector.extract_strided_slice %77 {offsets = [0, 384], sizes = [8, 128], strides = [1, 1]} : vector<8x512xf32> to vector<8x128xf32>
    %87 = math.tanh %86 : vector<8x128xf32>
    %88 = vector.extract_strided_slice %85 {offsets = [0, 0], sizes = [8, 128], strides = [1, 1]} : vector<8x384xf32> to vector<8x128xf32>
    %89 = vector.extract_strided_slice %85 {offsets = [0, 128], sizes = [8, 128], strides = [1, 1]} : vector<8x384xf32> to vector<8x128xf32>
    %90 = vector.extract_strided_slice %85 {offsets = [0, 256], sizes = [8, 128], strides = [1, 1]} : vector<8x384xf32> to vector<8x128xf32>
    %91 = arith.mulf %89, %64 : vector<8x128xf32>
    %92 = arith.mulf %88, %87 : vector<8x128xf32>
    %93 = arith.addf %91, %92 : vector<8x128xf32>
    %94 = math.tanh %93 : vector<8x128xf32>
    %95 = arith.mulf %90, %94 : vector<8x128xf32>
    %c0_41 = arith.constant 0 : index
    %96 = arith.index_cast %72 : i32 to index
    %c0_42 = arith.constant 0 : index
    %97 = vector.load %arg6[%c0_41, %96, %c0_42] : memref<1x32x128xf32, #tpu.memory_space<vmem>>, vector<1x8x128xf32>
    %98 = vector.shape_cast %97 : vector<1x8x128xf32> to vector<8x128xf32>
    %99 = vector.shape_cast %95 : vector<8x128xf32> to vector<1x8x128xf32>
    tpu.vector_store %arg6[%c0_41, %96, %c0_42], %99 {strides = array<i32>} : memref<1x32x128xf32, #tpu.memory_space<vmem>>, vector<1x8x128xf32>,
    %c3_i32 = arith.constant 3 : i32
    %c8_i32_43 = arith.constant 8 : i32
    %100 = arith.muli %c3_i32, %c8_i32_43 : i32
    %101 = tpu.assume_multiple %100, 8 : i32
    %102 = arith.index_cast %101 : i32 to index
    %c0_44 = arith.constant 0 : index
    %103 = vector.load %arg7[%102, %c0_44] : memref<32x512xf32, #tpu.memory_space<vmem>>, vector<8x512xf32>
    %c0_45 = arith.constant 0 : index
    %c0_46 = arith.constant 0 : index
    %104 = vector.load %arg4[%c0_45, %c0_46] : memref<128x512xf32, #tpu.memory_space<vmem>>, vector<128x512xf32>
    %cst_47 = arith.constant dense<0.000000e+00> : vector<8x512xf32>
    %105 = tpu.matmul %95, %104, %cst_47 {dimension_numbers = #tpu.dot_dimension_numbers<[1], [0], [0], [1], [0, 0, 1, 1], [], []>} : vector<8x128xf32>, vector<128x512xf32>, vector<8x512xf32> -> vector<8x512xf32>
    %106 = arith.addf %103, %105 : vector<8x512xf32>
    %107 = vector.extract_strided_slice %106 {offsets = [0, 0], sizes = [8, 384], strides = [1, 1]} : vector<8x512xf32> to vector<8x384xf32>
    %cst_48 = arith.constant 5.000000e-01 : f32
    %108 = vector.broadcast %cst_48 : f32 to vector<8x384xf32>
    %109 = arith.mulf %108, %107 : vector<8x384xf32>
    %110 = math.tanh %109 : vector<8x384xf32>
    %cst_49 = arith.constant 5.000000e-01 : f32
    %111 = vector.broadcast %cst_49 : f32 to vector<8x384xf32>
    %112 = arith.mulf %111, %110 : vector<8x384xf32>
    %cst_50 = arith.constant 5.000000e-01 : f32
    %113 = vector.broadcast %cst_50 : f32 to vector<8x384xf32>
    %114 = arith.addf %112, %113 : vector<8x384xf32>
    %115 = vector.extract_strided_slice %106 {offsets = [0, 384], sizes = [8, 128], strides = [1, 1]} : vector<8x512xf32> to vector<8x128xf32>
    %116 = math.tanh %115 : vector<8x128xf32>
    %117 = vector.extract_strided_slice %114 {offsets = [0, 0], sizes = [8, 128], strides = [1, 1]} : vector<8x384xf32> to vector<8x128xf32>
    %118 = vector.extract_strided_slice %114 {offsets = [0, 128], sizes = [8, 128], strides = [1, 1]} : vector<8x384xf32> to vector<8x128xf32>
    %119 = vector.extract_strided_slice %114 {offsets = [0, 256], sizes = [8, 128], strides = [1, 1]} : vector<8x384xf32> to vector<8x128xf32>
    %120 = arith.mulf %118, %93 : vector<8x128xf32>
    %121 = arith.mulf %117, %116 : vector<8x128xf32>
    %122 = arith.addf %120, %121 : vector<8x128xf32>
    %123 = math.tanh %122 : vector<8x128xf32>
    %124 = arith.mulf %119, %123 : vector<8x128xf32>
    %c0_51 = arith.constant 0 : index
    %125 = arith.index_cast %101 : i32 to index
    %c0_52 = arith.constant 0 : index
    %126 = vector.load %arg6[%c0_51, %125, %c0_52] : memref<1x32x128xf32, #tpu.memory_space<vmem>>, vector<1x8x128xf32>
    %127 = vector.shape_cast %126 : vector<1x8x128xf32> to vector<8x128xf32>
    %128 = vector.shape_cast %124 : vector<8x128xf32> to vector<1x8x128xf32>
    tpu.vector_store %arg6[%c0_51, %125, %c0_52], %128 {strides = array<i32>} : memref<1x32x128xf32, #tpu.memory_space<vmem>>, vector<1x8x128xf32>,
    %c4_i32 = arith.constant 4 : i32
    %c0_53 = arith.constant 0 : index
    %c0_54 = arith.constant 0 : index
    %129 = vector.load %arg8[%c0_53, %c0_54] : memref<8x128xf32, #tpu.memory_space<vmem>>, vector<8x128xf32>
    tpu.vector_store %arg8[%c0_53, %c0_54], %124 {strides = array<i32>} : memref<8x128xf32, #tpu.memory_space<vmem>>, vector<8x128xf32>,
    %c0_55 = arith.constant 0 : index
    %c0_56 = arith.constant 0 : index
    %130 = vector.load %arg9[%c0_55, %c0_56] : memref<8x128xf32, #tpu.memory_space<vmem>>, vector<8x128xf32>
    tpu.vector_store %arg9[%c0_55, %c0_56], %122 {strides = array<i32>} : memref<8x128xf32, #tpu.memory_space<vmem>>, vector<8x128xf32>,
    return
  }
  func.func @transform_0(%arg0: i32, %arg1: i32) -> (i32, i32, i32) {
    %c0_i32 = arith.constant 0 : i32
    %c0_i32_0 = arith.constant 0 : i32
    return %arg0, %arg1, %c0_i32 : i32, i32, i32
  }
  func.func @transform_1(%arg0: i32, %arg1: i32) -> (i32, i32) {
    %c0_i32 = arith.constant 0 : i32
    %c0_i32_0 = arith.constant 0 : i32
    %c0_i32_1 = arith.constant 0 : i32
    return %c0_i32, %c0_i32_0 : i32, i32
  }
  func.func @transform_2(%arg0: i32, %arg1: i32) -> (i32, i32) {
    %c0_i32 = arith.constant 0 : i32
    %c0_i32_0 = arith.constant 0 : i32
    %c0_i32_1 = arith.constant 0 : i32
    return %c0_i32, %c0_i32_0 : i32, i32
  }
  func.func @transform_3(%arg0: i32, %arg1: i32) -> (i32, i32) {
    %c0_i32 = arith.constant 0 : i32
    %c0_i32_0 = arith.constant 0 : i32
    %c0_i32_1 = arith.constant 0 : i32
    return %c0_i32, %c0_i32_0 : i32, i32
  }
  func.func @transform_4(%arg0: i32, %arg1: i32) -> (i32, i32, i32) {
    %c0_i32 = arith.constant 0 : i32
    %c0_i32_0 = arith.constant 0 : i32
    return %arg0, %arg1, %c0_i32 : i32, i32, i32
  }
}

</mosaic_0001>

<llo_original>
// kernel: tpu_custom_call.1
$region0: #{tpu_custom_call.1}
  #allocation0 [shape = 'u32[]', space=smem, size = 0x4, offset = 0x4, fixed_abs, tag = 'smem constant byte address 0x4 - core index']
  #allocation1 [shape = 'u32[72,128]{1,0:T(1,128)}', space=vmem, size = 0x9000, scoped, tag = 'internal scratch']
  #allocation2 [shape = 'f32[32,512]{1,0:T(8,128)}', space=vmem, size = 0x10000, scoped, tag = 'scratch operand']
  #allocation3 [shape = 'f32[8,128]{1,0:T(8,128)}', space=vmem, size = 0x1000, scoped, tag = 'scratch operand']
  #allocation4 [shape = 'f32[8,128]{1,0:T(8,128)}', space=vmem, size = 0x1000, scoped, tag = 'scratch operand']
  %s0 = inlined_call_operand.vmem [shape: f32[1,64,16], index: 0, kind: input, shape index: {}]
  %s1 = inlined_call_operand.vmem [shape: f32[16,512], index: 1, kind: input, shape index: {}]
  %s2 = inlined_call_operand.hbm [shape: f32[128,512], index: 2, kind: input, shape index: {}]
  %s3 = inlined_call_operand.vmem [shape: f32[1,512], index: 3, kind: input, shape index: {}]
  %s4 = inlined_call_operand.hbm [shape: f32[1,64,128], index: 4, kind: output, shape index: {}]
  %s5 = sld [smem:[#allocation0]]
  $region57: #{tpu_custom_call.1} parent=0
    _
  %s7 = ssub.s32 1, %s5
  %s8 = scalar_select 0, %s7, %s5
  $region1: #{tpu_custom_call.1} parent=0
    #allocation5 [shape = 'u8[262144]{0}', space=vmem, size = 0x40000, scoped, tag = 'input window, operand 2, single buffered']
    #allocation6 [shape = 's32[2]{0}', space=sflag, size = 0x8, scoped, tag = 'scoped memory for tpu_custom_call.1']
    #allocation7 [shape = 's32[2]{0}', space=sflag, size = 0x8, scoped, tag = 'scoped memory for tpu_custom_call.1']
    #allocation8 [shape = 'u8[32768]{0}', space=vmem, size = 0x8000, scoped, tag = 'output window, operand 0']
    %9 = vsyncpa [#allocation6], 0
    %10 = vsyncpa [#allocation7], 0
    %s11 = scalar_lea.sflag [#allocation7], 1
    %12 = vsyncpa %s11, 0
    loop: start=0, step=1, limit=4
    $region2: #{tpu_custom_call.1} parent=1 // loop_pre_header
      _
    $region3: #{tpu_custom_call.1} parent=1 // loop_header
      %s14 = sphi 0, %s18
      %p15 = scmp.ge.s32.totalorder %s14, 4
      %s21 = sphi 0, %s33
      %s22 = sphi 0, %s29
      %s23 = sphi 0, %s21
      %s24 = sphi 0, %s22
      %s25 = sphi 0, %s23
      %s26 = sphi 0, %s24
      %s38 = sphi 0, %s40
      %s41 = sphi 0, %s38
      %s42 = sphi 0, %s41
      %s58 = sphi 0, %s42
      %s62 = sphi 0, %s62
      %s64 = sphi 0, %s62
      %s65 = sphi 0, %s64
      %s79 = sphi 0, %s65
      %s83 = sphi 0, %s83
      %s85 = sphi 0, %s83
      %s86 = sphi 0, %s85
      %s100 = sphi 0, %s86
      %s104 = sphi 0, %s104
      %s106 = sphi 0, %s104
      %s107 = sphi 0, %s106
      %s121 = sphi 0, %s107
      %s129 = sphi 0, %s131
      %s132 = sphi 0, %s129
      %s133 = sphi 0, %s132
      %s149 = sphi 0, %s133
    $region4: #{tpu_custom_call.1} parent=1 // loop_header_branch
      %17 = sbr.rel (%p15) target = $region8
    $region5: #{tpu_custom_call.1} parent=1 // loop_body
      %s19 = ssub.s32 %s14, 1
      %s20 = ssub.s32 %s14, 2
      %s27 = sadd.s32 1, %s22
      %p28 = scmp.ge.s32.totalorder %s27, 2
      %s29 = scalar_select %p28, 0, %s27
      %s30 = sadd.s32 1, %s21
      %s31 = scalar_select %p28, %s30, %s21
      %p32 = scmp.ge.s32.totalorder %s31, 1
      %s33 = scalar_select %p32, 0, %s31
      %s34 = ssub.s32 %s21, %s33
      %s35 = ssub.s32 %s22, %s29
      %s36 = sor.u32 %s34, %s35
      %p37 = scmp.eq.s32.totalorder %s36, 0
      %s39 = sadd.s32 %s38, 1
      %s40 = scalar_select %p37, %s38, %s39
      %p43 = pneg %p37
      %p44 = scmp.eq.s32.totalorder %s14, 1
      %p45 = por %p43, %p44
      %p46 = scmp.ne.s32.totalorder %s38, %s41
      %p47 = scmp.eq.s32.totalorder %s14, 0
      %p48 = por %p46, %p47
      %p49 = scmp.ne.s32.totalorder %s38, %s41
      %p50 = scmp.eq.s32.totalorder %s19, 1
      %p51 = por %p49, %p50
      %p52 = scmp.ne.s32.totalorder %s41, %s42
      %p53 = scmp.eq.s32.totalorder %s19, 0
      %p54 = por %p52, %p53
      %p55 = scmp.ne.s32.totalorder %s41, %s42
      %p56 = scmp.eq.s32.totalorder %s20, 1
      %p57 = por %p55, %p56
      %p59 = scmp.ne.s32.totalorder %s42, %s58
      %p60 = scmp.eq.s32.totalorder %s20, 0
      %p61 = por %p59, %p60
      %s63 = sadd.s32 %s62, 1
      %p66 = scmp.eq.s32.totalorder %s14, 1
      %p67 = scmp.ne.s32.totalorder %s62, %s64
      %p68 = scmp.eq.s32.totalorder %s14, 0
      %p69 = por %p67, %p68
      %p70 = scmp.ne.s32.totalorder %s62, %s64
      %p71 = scmp.eq.s32.totalorder %s19, 1
      %p72 = por %p70, %p71
      %p73 = scmp.ne.s32.totalorder %s64, %s65
      %p74 = scmp.eq.s32.totalorder %s19, 0
      %p75 = por %p73, %p74
      %p76 = scmp.ne.s32.totalorder %s64, %s65
      %p77 = scmp.eq.s32.totalorder %s20, 1
      %p78 = por %p76, %p77
      %p80 = scmp.ne.s32.totalorder %s65, %s79
      %p81 = scmp.eq.s32.totalorder %s20, 0
      %p82 = por %p80, %p81
      %s84 = sadd.s32 %s83, 1
      %p87 = scmp.eq.s32.totalorder %s14, 1
      %p88 = scmp.ne.s32.totalorder %s83, %s85
      %p89 = scmp.eq.s32.totalorder %s14, 0
      %p90 = por %p88, %p89
      %p91 = scmp.ne.s32.totalorder %s83, %s85
      %p92 = scmp.eq.s32.totalorder %s19, 1
      %p93 = por %p91, %p92
      %p94 = scmp.ne.s32.totalorder %s85, %s86
      %p95 = scmp.eq.s32.totalorder %s19, 0
      %p96 = por %p94, %p95
      %p97 = scmp.ne.s32.totalorder %s85, %s86
      %p98 = scmp.eq.s32.totalorder %s20, 1
      %p99 = por %p97, %p98
      %p101 = scmp.ne.s32.totalorder %s86, %s100
      %p102 = scmp.eq.s32.totalorder %s20, 0
      %p103 = por %p101, %p102
      %s105 = sadd.s32 %s104, 1
      %p108 = scmp.eq.s32.totalorder %s14, 1
      %p109 = scmp.ne.s32.totalorder %s104, %s106
      %p110 = scmp.eq.s32.totalorder %s14, 0
      %p111 = por %p109, %p110
      %p112 = scmp.ne.s32.totalorder %s104, %s106
      %p113 = scmp.eq.s32.totalorder %s19, 1
      %p114 = por %p112, %p113
      %p115 = scmp.ne.s32.totalorder %s106, %s107
      %p116 = scmp.eq.s32.totalorder %s19, 0
      %p117 = por %p115, %p116
      %p118 = scmp.ne.s32.totalorder %s106, %s107
      %p119 = scmp.eq.s32.totalorder %s20, 1
      %p120 = por %p118, %p119
      %p122 = scmp.ne.s32.totalorder %s107, %s121
      %p123 = scmp.eq.s32.totalorder %s20, 0
      %p124 = por %p122, %p123
      %s125 = ssub.s32 %s21, %s33
      %s126 = ssub.s32 %s22, %s29
      %s127 = sor.u32 %s125, %s126
      %p128 = scmp.eq.s32.totalorder %s127, 0
      %s130 = sadd.s32 %s129, 1
      %s131 = scalar_select %p128, %s129, %s130
      %p134 = pneg %p128
      %p135 = scmp.eq.s32.totalorder %s14, 1
      %p136 = por %p134, %p135
      %p137 = scmp.ne.s32.totalorder %s129, %s132
      %p138 = scmp.eq.s32.totalorder %s14, 0
      %p139 = por %p137, %p138
      %p140 = scmp.ne.s32.totalorder %s129, %s132
      %p141 = scmp.eq.s32.totalorder %s19, 1
      %p142 = por %p140, %p141
      %p143 = scmp.ne.s32.totalorder %s132, %s133
      %p144 = scmp.eq.s32.totalorder %s19, 0
      %p145 = por %p143, %p144
      %p146 = scmp.ne.s32.totalorder %s132, %s133
      %p147 = scmp.eq.s32.totalorder %s20, 1
      %p148 = por %p146, %p147
      %p150 = scmp.ne.s32.totalorder %s133, %s149
      %p151 = scmp.eq.s32.totalorder %s20, 0
      %p152 = por %p150, %p151
      %p153 = scmp.le.s32.totalorder 1, %s14
      %p154 = scmp.lt.s32.totalorder %s14, 3
      %p155 = pnand %p153, %p154
      %p156 = pneg %p155
      // Predicated region
      $region9: #{tpu_custom_call.1} parent=5 // pred_check
        _
      $region10: #{tpu_custom_call.1} parent=5 // pred_check_branch
        %158 = sbr.rel (%p155) target = $region12
      $region11: #{tpu_custom_call.1} parent=5 // pred_region
        %s159 = ssub.s32 %s14, 1
        // Predicated region
        $region13: #{tpu_custom_call.1} parent=11 // pred_check
          %p160 = pneg %p75
        $region14: #{tpu_custom_call.1} parent=11 // pred_check_branch
          %162 = sbr.rel (%p160) target = $region16
        $region15: #{tpu_custom_call.1} parent=11 // pred_region
          _
        $region16: #{tpu_custom_call.1} parent=11 // pred_fallthru
          _
        // Predicated region
        $region17: #{tpu_custom_call.1} parent=11 // pred_check
          %p163 = pneg %p96
        $region18: #{tpu_custom_call.1} parent=11 // pred_check_branch
          %165 = sbr.rel (%p163) target = $region20
        $region19: #{tpu_custom_call.1} parent=11 // pred_region
          %167 = vsyncadd [#allocation6], 0
          %s168 = sshll.u32 %s2, 4
          %s169 = int_to_ptr.hbm [resolvable:$true] %s168
          %s170 = sshll.u32 [#allocation5], 4
          %s171 = int_to_ptr.vmem [resolvable:$true] %s170
          %176 = dma.hbm_to_vmem [thread:$0]  %s169, 8192, %s171, [#allocation6], 512, 512, 32
        $region20: #{tpu_custom_call.1} parent=11 // pred_fallthru
          _
        // Predicated region
        $region21: #{tpu_custom_call.1} parent=11 // pred_check
          %p177 = pneg %p117
        $region22: #{tpu_custom_call.1} parent=11 // pred_check_branch
          %179 = sbr.rel (%p177) target = $region24
        $region23: #{tpu_custom_call.1} parent=11 // pred_region
          _
        $region24: #{tpu_custom_call.1} parent=11 // pred_fallthru
          _
      $region12: #{tpu_custom_call.1} parent=5 // pred_fallthru
        _
      %p180 = scmp.lt.s32.totalorder %s14, 2
      // Predicated region
      $region25: #{tpu_custom_call.1} parent=5 // pred_check
        %p181 = pneg %p180
      $region26: #{tpu_custom_call.1} parent=5 // pred_check_branch
        %183 = sbr.rel (%p181) target = $region28
      $region27: #{tpu_custom_call.1} parent=5 // pred_region
        // Predicated region
        $region29: #{tpu_custom_call.1} parent=27 // pred_check
          %p184 = pneg %p48
        $region30: #{tpu_custom_call.1} parent=27 // pred_check_branch
          %186 = sbr.rel (%p184) target = $region32
        $region31: #{tpu_custom_call.1} parent=27 // pred_region
          %s187 = smul.u32 4, %s22
          %p188 = scmp.lt.s32.totalorder %s21, 0
          %s189 = scalar_select %p188, %s21, 0
          %p190 = scmp.lt.s32.totalorder %s187, 7
          %s191 = scalar_select %p190, %s187, 7
          %s192 = smul.addr %s189, 8
          %s193 = sadd.s32 %s191, %s192
          %s194 = smul.addr %s193, 8
          %s195 = scalar_lea.vmem %s0, %s194
          %s196 = smul.u32 4, %s22
        $region32: #{tpu_custom_call.1} parent=27 // pred_fallthru
          _
      $region28: #{tpu_custom_call.1} parent=5 // pred_fallthru
        _
      %p197 = scmp.le.s32.totalorder 1, %s14
      %p198 = scmp.lt.s32.totalorder %s14, 3
      %p199 = pnand %p197, %p198
      %p200 = pneg %p199
      // Predicated region
      $region33: #{tpu_custom_call.1} parent=5 // pred_check
        _
      $region34: #{tpu_custom_call.1} parent=5 // pred_check_branch
        %202 = sbr.rel (%p199) target = $region36
      $region35: #{tpu_custom_call.1} parent=5 // pred_region
        %s203 = ssub.s32 %s14, 1
        // Predicated region
        $region37: #{tpu_custom_call.1} parent=35 // pred_check
          %p204 = pneg %p96
        $region38: #{tpu_custom_call.1} parent=35 // pred_check_branch
          %206 = sbr.rel (%p204) target = $region40
        $region39: #{tpu_custom_call.1} parent=35 // pred_region
          %208 = dma.done [#allocation6], 8192
        $region40: #{tpu_custom_call.1} parent=35 // pred_fallthru
          _
        %s209 = smul.u32 4, %s24
        %p210 = scmp.lt.s32.totalorder %s23, 0
        %s211 = scalar_select %p210, %s23, 0
        %p212 = scmp.lt.s32.totalorder %s209, 7
        %s213 = scalar_select %p212, %s209, 7
        %s214 = smul.addr %s211, 8
        %s215 = sadd.s32 %s213, %s214
        %s216 = smul.addr %s215, 8
        %s217 = scalar_lea.vmem %s0, %s216
        %p218 = pneg %p54
        %p219 = pneg %p51
        %p220 = pneg %p75
        %p221 = pneg %p72
        %p222 = pneg %p96
        %p223 = pneg %p93
        %p224 = pneg %p117
        %p225 = pneg %p114
        %p226 = pneg %p145
        %p227 = pneg %p142
        %s228 = sand.u32 %s132, 1
        %s229 = scalar_lea.sflag [#allocation7], %s228
        %s230 = sand.u32 %s132, 1
        %s231 = smul.addr %s230, 32
        %s232 = scalar_lea.vmem [#allocation8], %s231
        %s233 = smul.u32 4, %s24
        %p234 = scmp.lt.s32.totalorder %s23, 0
        %s235 = scalar_select %p234, %s23, 0
        %p236 = scmp.lt.s32.totalorder %s233, 7
        %s237 = scalar_select %p236, %s233, 7
        %s238 = smul.addr %s235, 8
        %s239 = sadd.s32 %s237, %s238
        %s240 = smul.addr %s239, 8
        %s241 = scalar_lea.vmem %s0, %s240
        %s242 = smul.u32 4, %s24
        %s243 = smul.u32 4, %s24
        %p244 = scmp.eq.s32.totalorder %s24, 0
        // Predicated region
        $region41: #{tpu_custom_call.1} parent=35 // pred_check
          %p245 = pneg %p244
        $region42: #{tpu_custom_call.1} parent=35 // pred_check_branch
          %247 = sbr.rel (%p245) target = $region44
        $region43: #{tpu_custom_call.1} parent=35 // pred_region
          %248 = vst [vmem:[#allocation3] sm:$0xff] 0.0
          %249 = vst [vmem:[#allocation4] sm:$0xff] 0.0
        $region44: #{tpu_custom_call.1} parent=35 // pred_fallthru
          _
        %v250 = vld [vmem:[%s241] sm:$0xff]
        %v251 = vld [vmem:[%s241 + $0x8] sm:$0xff]
        %v252 = vld [vmem:[%s241 + $0x10] sm:$0xff]
        %v253 = vld [vmem:[%s241 + $0x18] sm:$0xff]
        %v254 = vld [vmem:[%s1] sm:$0xff]
        %v255 = vld [vmem:[%s1 + $0x8] sm:$0xff]
        %v256 = vld [vmem:[%s1 + $0x10] sm:$0xff]
        %v257 = vld [vmem:[%s1 + $0x18] sm:$0xff]
        %v258 = vld [vmem:[%s1 + $0x20] sm:$0xff]
        %v259 = vld [vmem:[%s1 + $0x28] sm:$0xff]
        %v260 = vld [vmem:[%s1 + $0x30] sm:$0xff]
        %v261 = vld [vmem:[%s1 + $0x38] sm:$0xff]
        %v262 = vld [vmem:[%s3] sm:$0xf]
        %v264 = vperm.slane %v262, 0
        %v265 = vperm.slane %v262, 1
        %v266 = vperm.slane %v262, 2
        %v267 = vperm.slane %v262, 3
        %vm272 = vcmask 130048
        %v274 = vsel %vm272, %v250, 0
        %v277 = vsel %vm272, %v251, 0
        %v280 = vsel %vm272, %v252, 0
        %v283 = vsel %vm272, %v253, 0
        %285 = vmatpush.msra.mxu0 0.0
        %286 = vmatpush.msra.mxu0 0.0
        %287 = vmatpush.msra.mxu0 0.0
        %288 = vmatpush.msra.mxu0 0.0
        %289 = vmatpush.msra.mxu0 0.0
        %290 = vmatpush.msra.mxu0 0.0
        %291 = vmatpush.msra.mxu0 0.0
        %292 = vmatpush.msra.mxu0 0.0
        %293 = vmatpush.msra.mxu0 0.0
        %294 = vmatpush.msra.mxu0 0.0
        %295 = vmatpush.msra.mxu0 0.0
        %296 = vmatpush.msra.mxu0 0.0
        %297 = vmatpush.msra.mxu0 0.0
        %298 = vmatpush.msra.mxu0 0.0
        %299 = vmatpush.msra.mxu0 %v258
        %300 = vmatpush.msra.mxu0 %v254
        %301 = vmatmul.f32.gmra.mxu0 %v274
        %v302 = vpop.f32.mrf.mxu0
        %v303 = vadd.f32 %v264, %v302
        %304 = vmatmul.f32.gmra.mxu0 %v277
        %v305 = vpop.f32.mrf.mxu0
        %v306 = vadd.f32 %v264, %v305
        %307 = vmatmul.f32.gmra.mxu0 %v280
        %v308 = vpop.f32.mrf.mxu0
        %v309 = vadd.f32 %v264, %v308
        %310 = vmatmul.f32.gmra.mxu0 %v283
        %v311 = vpop.f32.mrf.mxu0
        %v312 = vadd.f32 %v264, %v311
        %313 = vdwg.mxu0
        %314 = vmatpush.msra.mxu0 0.0
        %315 = vmatpush.msra.mxu0 0.0
        %316 = vmatpush.msra.mxu0 0.0
        %317 = vmatpush.msra.mxu0 0.0
        %318 = vmatpush.msra.mxu0 0.0
        %319 = vmatpush.msra.mxu0 0.0
        %320 = vmatpush.msra.mxu0 0.0
        %321 = vmatpush.msra.mxu0 0.0
        %322 = vmatpush.msra.mxu0 0.0
        %323 = vmatpush.msra.mxu0 0.0
        %324 = vmatpush.msra.mxu0 0.0
        %325 = vmatpush.msra.mxu0 0.0
        %326 = vmatpush.msra.mxu0 0.0
        %327 = vmatpush.msra.mxu0 0.0
        %328 = vmatpush.msra.mxu0 %v259
        %329 = vmatpush.msra.mxu0 %v255
        %330 = vmatmul.f32.gmra.mxu0 %v274
        %v331 = vpop.f32.mrf.mxu0
        %v332 = vadd.f32 %v265, %v331
        %333 = vmatmul.f32.gmra.mxu0 %v277
        %v334 = vpop.f32.mrf.mxu0
        %v335 = vadd.f32 %v265, %v334
        %336 = vmatmul.f32.gmra.mxu0 %v280
        %v337 = vpop.f32.mrf.mxu0
        %v338 = vadd.f32 %v265, %v337
        %339 = vmatmul.f32.gmra.mxu0 %v283
        %v340 = vpop.f32.mrf.mxu0
        %v341 = vadd.f32 %v265, %v340
        %342 = vdwg.mxu0
        %343 = vmatpush.msra.mxu0 0.0
        %344 = vmatpush.msra.mxu0 0.0
        %345 = vmatpush.msra.mxu0 0.0
        %346 = vmatpush.msra.mxu0 0.0
        %347 = vmatpush.msra.mxu0 0.0
        %348 = vmatpush.msra.mxu0 0.0
        %349 = vmatpush.msra.mxu0 0.0
        %350 = vmatpush.msra.mxu0 0.0
        %351 = vmatpush.msra.mxu0 0.0
        %352 = vmatpush.msra.mxu0 0.0
        %353 = vmatpush.msra.mxu0 0.0
        %354 = vmatpush.msra.mxu0 0.0
        %355 = vmatpush.msra.mxu0 0.0
        %356 = vmatpush.msra.mxu0 0.0
        %357 = vmatpush.msra.mxu0 %v260
        %358 = vmatpush.msra.mxu0 %v256
        %359 = vmatmul.f32.gmra.mxu0 %v274
        %v360 = vpop.f32.mrf.mxu0
        %v361 = vadd.f32 %v266, %v360
        %362 = vmatmul.f32.gmra.mxu0 %v277
        %v363 = vpop.f32.mrf.mxu0
        %v364 = vadd.f32 %v266, %v363
        %365 = vmatmul.f32.gmra.mxu0 %v280
        %v366 = vpop.f32.mrf.mxu0
        %v367 = vadd.f32 %v266, %v366
        %368 = vmatmul.f32.gmra.mxu0 %v283
        %v369 = vpop.f32.mrf.mxu0
        %v370 = vadd.f32 %v266, %v369
        %371 = vdwg.mxu0
        %372 = vmatpush.msra.mxu0 0.0
        %373 = vmatpush.msra.mxu0 0.0
        %374 = vmatpush.msra.mxu0 0.0
        %375 = vmatpush.msra.mxu0 0.0
        %376 = vmatpush.msra.mxu0 0.0
        %377 = vmatpush.msra.mxu0 0.0
        %378 = vmatpush.msra.mxu0 0.0
        %379 = vmatpush.msra.mxu0 0.0
        %380 = vmatpush.msra.mxu0 0.0
        %381 = vmatpush.msra.mxu0 0.0
        %382 = vmatpush.msra.mxu0 0.0
        %383 = vmatpush.msra.mxu0 0.0
        %384 = vmatpush.msra.mxu0 0.0
        %385 = vmatpush.msra.mxu0 0.0
        %386 = vmatpush.msra.mxu0 %v261
        %387 = vmatpush.msra.mxu0 %v257
        %388 = vmatmul.f32.gmra.mxu0 %v274
        %v389 = vpop.f32.mrf.mxu0
        %v390 = vadd.f32 %v267, %v389
        %391 = vmatmul.f32.gmra.mxu0 %v277
        %v392 = vpop.f32.mrf.mxu0
        %v393 = vadd.f32 %v267, %v392
        %394 = vmatmul.f32.gmra.mxu0 %v280
        %v395 = vpop.f32.mrf.mxu0
        %v396 = vadd.f32 %v267, %v395
        %397 = vmatmul.f32.gmra.mxu0 %v283
        %v398 = vpop.f32.mrf.mxu0
        %v399 = vadd.f32 %v267, %v398
        %400 = vdwg.mxu0
        %401 = vst [vmem:[#allocation2] sm:$0xff] %v303
        %402 = vst [vmem:[#allocation2 + $0x8] sm:$0xff] %v332
        %403 = vst [vmem:[#allocation2 + $0x10] sm:$0xff] %v361
        %404 = vst [vmem:[#allocation2 + $0x18] sm:$0xff] %v390
        %405 = vst [vmem:[#allocation2 + $0x20] sm:$0xff] %v306
        %406 = vst [vmem:[#allocation2 + $0x28] sm:$0xff] %v335
        %407 = vst [vmem:[#allocation2 + $0x30] sm:$0xff] %v364
        %408 = vst [vmem:[#allocation2 + $0x38] sm:$0xff] %v393
        %409 = vst [vmem:[#allocation2 + $0x40] sm:$0xff] %v309
        %410 = vst [vmem:[#allocation2 + $0x48] sm:$0xff] %v338
        %411 = vst [vmem:[#allocation2 + $0x50] sm:$0xff] %v367
        %412 = vst [vmem:[#allocation2 + $0x58] sm:$0xff] %v396
        %413 = vst [vmem:[#allocation2 + $0x60] sm:$0xff] %v312
        %414 = vst [vmem:[#allocation2 + $0x68] sm:$0xff] %v341
        %415 = vst [vmem:[#allocation2 + $0x70] sm:$0xff] %v370
        %416 = vst [vmem:[#allocation2 + $0x78] sm:$0xff] %v399
        %v417 = vld [vmem:[#allocation3] sm:$0xff]
        %v418 = vld [vmem:[#allocation4] sm:$0xff]
        %s419 = smul.u32 0, 4
        %s420 = smul.addr %s419, 8
        %s421 = scalar_lea.vmem [#allocation2], %s420
        %v422 = vld [vmem:[%s421] sm:$0xff]
        %v423 = vld [vmem:[%s421 + $0x8] sm:$0xff]
        %v424 = vld [vmem:[%s421 + $0x10] sm:$0xff]
        %v425 = vld [vmem:[%s421 + $0x18] sm:$0xff]
        %v426 = vld [vmem:[#allocation5] sm:$0xff]
        %v427 = vld [vmem:[#allocation5 + $0x8] sm:$0xff]
        %v428 = vld [vmem:[#allocation5 + $0x10] sm:$0xff]
        %v429 = vld [vmem:[#allocation5 + $0x18] sm:$0xff]
        %v430 = vld [vmem:[#allocation5 + $0x20] sm:$0xff]
        %v431 = vld [vmem:[#allocation5 + $0x28] sm:$0xff]
        %v432 = vld [vmem:[#allocation5 + $0x30] sm:$0xff]
        %v433 = vld [vmem:[#allocation5 + $0x38] sm:$0xff]
        %v434 = vld [vmem:[#allocation5 + $0x40] sm:$0xff]
        %v435 = vld [vmem:[#allocation5 + $0x48] sm:$0xff]
        %v436 = vld [vmem:[#allocation5 + $0x50] sm:$0xff]
        %v437 = vld [vmem:[#allocation5 + $0x58] sm:$0xff]
        %v438 = vld [vmem:[#allocation5 + $0x60] sm:$0xff]
        %v439 = vld [vmem:[#allocation5 + $0x68] sm:$0xff]
        %v440 = vld [vmem:[#allocation5 + $0x70] sm:$0xff]
        %v441 = vld [vmem:[#allocation5 + $0x78] sm:$0xff]
        %v442 = vld [vmem:[#allocation5 + $0x80] sm:$0xff]
        %v443 = vld [vmem:[#allocation5 + $0x88] sm:$0xff]
        %v444 = vld [vmem:[#allocation5 + $0x90] sm:$0xff]
        %v445 = vld [vmem:[#allocation5 + $0x98] sm:$0xff]
        %v446 = vld [vmem:[#allocation5 + $0xa0] sm:$0xff]
        %v447 = vld [vmem:[#allocation5 + $0xa8] sm:$0xff]
        %v448 = vld [vmem:[#allocation5 + $0xb0] sm:$0xff]
        %v449 = vld [vmem:[#allocation5 + $0xb8] sm:$0xff]
        %v450 = vld [vmem:[#allocation5 + $0xc0] sm:$0xff]
        %v451 = vld [vmem:[#allocation5 + $0xc8] sm:$0xff]
        %v452 = vld [vmem:[#allocation5 + $0xd0] sm:$0xff]
        %v453 = vld [vmem:[#allocation5 + $0xd8] sm:$0xff]
        %v454 = vld [vmem:[#allocation5 + $0xe0] sm:$0xff]
        %v455 = vld [vmem:[#allocation5 + $0xe8] sm:$0xff]
        %v456 = vld [vmem:[#allocation5 + $0xf0] sm:$0xff]
        %v457 = vld [vmem:[#allocation5 + $0xf8] sm:$0xff]
        %v458 = vld [vmem:[#allocation5 + $0x100] sm:$0xff]
        %v459 = vld [vmem:[#allocation5 + $0x108] sm:$0xff]
        %v460 = vld [vmem:[#allocation5 + $0x110] sm:$0xff]
        %v461 = vld [vmem:[#allocation5 + $0x118] sm:$0xff]
        %v462 = vld [vmem:[#allocation5 + $0x120] sm:$0xff]
        %v463 = vld [vmem:[#allocation5 + $0x128] sm:$0xff]
        %v464 = vld [vmem:[#allocation5 + $0x130] sm:$0xff]
        %v465 = vld [vmem:[#allocation5 + $0x138] sm:$0xff]
        %v466 = vld [vmem:[#allocation5 + $0x140] sm:$0xff]
        %v467 = vld [vmem:[#allocation5 + $0x148] sm:$0xff]
        %v468 = vld [vmem:[#allocation5 + $0x150] sm:$0xff]
        %v469 = vld [vmem:[#allocation5 + $0x158] sm:$0xff]
        %v470 = vld [vmem:[#allocation5 + $0x160] sm:$0xff]
        %v471 = vld [vmem:[#allocation5 + $0x168] sm:$0xff]
        %v472 = vld [vmem:[#allocation5 + $0x170] sm:$0xff]
        %v473 = vld [vmem:[#allocation5 + $0x178] sm:$0xff]
        %v474 = vld [vmem:[#allocation5 + $0x180] sm:$0xff]
        %v475 = vld [vmem:[#allocation5 + $0x188] sm:$0xff]
        %v476 = vld [vmem:[#allocation5 + $0x190] sm:$0xff]
        %v477 = vld [vmem:[#allocation5 + $0x198] sm:$0xff]
        %v478 = vld [vmem:[#allocation5 + $0x1a0] sm:$0xff]
        %v479 = vld [vmem:[#allocation5 + $0x1a8] sm:$0xff]
        %v480 = vld [vmem:[#allocation5 + $0x1b0] sm:$0xff]
        %v481 = vld [vmem:[#allocation5 + $0x1b8] sm:$0xff]
        %v482 = vld [vmem:[#allocation5 + $0x1c0] sm:$0xff]
        %v483 = vld [vmem:[#allocation5 + $0x1c8] sm:$0xff]
        %v484 = vld [vmem:[#allocation5 + $0x1d0] sm:$0xff]
        %v485 = vld [vmem:[#allocation5 + $0x1d8] sm:$0xff]
        %v486 = vld [vmem:[#allocation5 + $0x1e0] sm:$0xff]
        %v487 = vld [vmem:[#allocation5 + $0x1e8] sm:$0xff]
        %v488 = vld [vmem:[#allocation5 + $0x1f0] sm:$0xff]
        %v489 = vld [vmem:[#allocation5 + $0x1f8] sm:$0xff]
        %490 = vmatpush.msra.mxu0 %v486
        %491 = vmatpush.msra.mxu0 %v482
        %492 = vmatpush.msra.mxu0 %v478
        %493 = vmatpush.msra.mxu0 %v474
        %494 = vmatpush.msra.mxu0 %v470
        %495 = vmatpush.msra.mxu0 %v466
        %496 = vmatpush.msra.mxu0 %v462
        %497 = vmatpush.msra.mxu0 %v458
        %498 = vmatpush.msra.mxu0 %v454
        %499 = vmatpush.msra.mxu0 %v450
        %500 = vmatpush.msra.mxu0 %v446
        %501 = vmatpush.msra.mxu0 %v442
        %502 = vmatpush.msra.mxu0 %v438
        %503 = vmatpush.msra.mxu0 %v434
        %504 = vmatpush.msra.mxu0 %v430
        %505 = vmatpush.msra.mxu0 %v426
        %506 = vmatmul.f32.gmra.mxu0 %v417
        %v507 = vpop.f32.mrf.mxu0
        %v508 = vadd.f32 0.0, %v507
        %509 = vdwg.mxu0
        %510 = vmatpush.msra.mxu0 %v487
        %511 = vmatpush.msra.mxu0 %v483
        %512 = vmatpush.msra.mxu0 %v479
        %513 = vmatpush.msra.mxu0 %v475
        %514 = vmatpush.msra.mxu0 %v471
        %515 = vmatpush.msra.mxu0 %v467
        %516 = vmatpush.msra.mxu0 %v463
        %517 = vmatpush.msra.mxu0 %v459
        %518 = vmatpush.msra.mxu0 %v455
        %519 = vmatpush.msra.mxu0 %v451
        %520 = vmatpush.msra.mxu0 %v447
        %521 = vmatpush.msra.mxu0 %v443
        %522 = vmatpush.msra.mxu0 %v439
        %523 = vmatpush.msra.mxu0 %v435
        %524 = vmatpush.msra.mxu0 %v431
        %525 = vmatpush.msra.mxu0 %v427
        %526 = vmatmul.f32.gmra.mxu0 %v417
        %v527 = vpop.f32.mrf.mxu0
        %v528 = vadd.f32 0.0, %v527
        %529 = vdwg.mxu0
        %530 = vmatpush.msra.mxu0 %v488
        %531 = vmatpush.msra.mxu0 %v484
        %532 = vmatpush.msra.mxu0 %v480
        %533 = vmatpush.msra.mxu0 %v476
        %534 = vmatpush.msra.mxu0 %v472
        %535 = vmatpush.msra.mxu0 %v468
        %536 = vmatpush.msra.mxu0 %v464
        %537 = vmatpush.msra.mxu0 %v460
        %538 = vmatpush.msra.mxu0 %v456
        %539 = vmatpush.msra.mxu0 %v452
        %540 = vmatpush.msra.mxu0 %v448
        %541 = vmatpush.msra.mxu0 %v444
        %542 = vmatpush.msra.mxu0 %v440
        %543 = vmatpush.msra.mxu0 %v436
        %544 = vmatpush.msra.mxu0 %v432
        %545 = vmatpush.msra.mxu0 %v428
        %546 = vmatmul.f32.gmra.mxu0 %v417
        %v547 = vpop.f32.mrf.mxu0
        %v548 = vadd.f32 0.0, %v547
        %549 = vdwg.mxu0
        %550 = vmatpush.msra.mxu0 %v489
        %551 = vmatpush.msra.mxu0 %v485
        %552 = vmatpush.msra.mxu0 %v481
        %553 = vmatpush.msra.mxu0 %v477
        %554 = vmatpush.msra.mxu0 %v473
        %555 = vmatpush.msra.mxu0 %v469
        %556 = vmatpush.msra.mxu0 %v465
        %557 = vmatpush.msra.mxu0 %v461
        %558 = vmatpush.msra.mxu0 %v457
        %559 = vmatpush.msra.mxu0 %v453
        %560 = vmatpush.msra.mxu0 %v449
        %561 = vmatpush.msra.mxu0 %v445
        %562 = vmatpush.msra.mxu0 %v441
        %563 = vmatpush.msra.mxu0 %v437
        %564 = vmatpush.msra.mxu0 %v433
        %565 = vmatpush.msra.mxu0 %v429
        %566 = vmatmul.f32.gmra.mxu0 %v417
        %v567 = vpop.f32.mrf.mxu0
        %v568 = vadd.f32 0.0, %v567
        %569 = vdwg.mxu0
        %v570 = vadd.f32 %v422, %v508
        %v571 = vadd.f32 %v423, %v528
        %v572 = vadd.f32 %v424, %v548
        %v573 = vadd.f32 %v425, %v568
        %v574 = vmul.f32 %v570, 0.5
        %v575 = vmul.f32 %v571, 0.5
        %v576 = vmul.f32 %v572, 0.5
        %v577 = vtanh.pop %v574
        %v578 = vtanh.pop %v575
        %v579 = vtanh.pop %v576
        %v580 = vmul.f32 %v577, 0.5
        %v581 = vmul.f32 %v578, 0.5
        %v582 = vmul.f32 %v579, 0.5
        %v583 = vadd.f32 %v580, 0.5
        %v584 = vadd.f32 %v581, 0.5
        %v585 = vadd.f32 %v582, 0.5
        %v586 = vtanh.pop %v573
        %v587 = vmul.f32 %v584, %v418
        %v588 = vmul.f32 %v583, %v586
        %v589 = vadd.f32 %v587, %v588
        %v590 = vtanh.pop %v589
        %v591 = vmul.f32 %v585, %v590
        %592 = vst [vmem:[%s232] sm:$0xff] %v591
        %s593 = smul.u32 1, 4
        %s594 = smul.addr %s593, 8
        %s595 = scalar_lea.vmem [#allocation2], %s594
        %v596 = vld [vmem:[%s595] sm:$0xff]
        %v597 = vld [vmem:[%s595 + $0x8] sm:$0xff]
        %v598 = vld [vmem:[%s595 + $0x10] sm:$0xff]
        %v599 = vld [vmem:[%s595 + $0x18] sm:$0xff]
        %v600 = vld [vmem:[#allocation5] sm:$0xff]
        %v601 = vld [vmem:[#allocation5 + $0x8] sm:$0xff]
        %v602 = vld [vmem:[#allocation5 + $0x10] sm:$0xff]
        %v603 = vld [vmem:[#allocation5 + $0x18] sm:$0xff]
        %v604 = vld [vmem:[#allocation5 + $0x20] sm:$0xff]
        %v605 = vld [vmem:[#allocation5 + $0x28] sm:$0xff]
        %v606 = vld [vmem:[#allocation5 + $0x30] sm:$0xff]
        %v607 = vld [vmem:[#allocation5 + $0x38] sm:$0xff]
        %v608 = vld [vmem:[#allocation5 + $0x40] sm:$0xff]
        %v609 = vld [vmem:[#allocation5 + $0x48] sm:$0xff]
        %v610 = vld [vmem:[#allocation5 + $0x50] sm:$0xff]
        %v611 = vld [vmem:[#allocation5 + $0x58] sm:$0xff]
        %v612 = vld [vmem:[#allocation5 + $0x60] sm:$0xff]
        %v613 = vld [vmem:[#allocation5 + $0x68] sm:$0xff]
        %v614 = vld [vmem:[#allocation5 + $0x70] sm:$0xff]
        %v615 = vld [vmem:[#allocation5 + $0x78] sm:$0xff]
        %v616 = vld [vmem:[#allocation5 + $0x80] sm:$0xff]
        %v617 = vld [vmem:[#allocation5 + $0x88] sm:$0xff]
        %v618 = vld [vmem:[#allocation5 + $0x90] sm:$0xff]
        %v619 = vld [vmem:[#allocation5 + $0x98] sm:$0xff]
        %v620 = vld [vmem:[#allocation5 + $0xa0] sm:$0xff]
        %v621 = vld [vmem:[#allocation5 + $0xa8] sm:$0xff]
        %v622 = vld [vmem:[#allocation5 + $0xb0] sm:$0xff]
        %v623 = vld [vmem:[#allocation5 + $0xb8] sm:$0xff]
        %v624 = vld [vmem:[#allocation5 + $0xc0] sm:$0xff]
        %v625 = vld [vmem:[#allocation5 + $0xc8] sm:$0xff]
        %v626 = vld [vmem:[#allocation5 + $0xd0] sm:$0xff]
        %v627 = vld [vmem:[#allocation5 + $0xd8] sm:$0xff]
        %v628 = vld [vmem:[#allocation5 + $0xe0] sm:$0xff]
        %v629 = vld [vmem:[#allocation5 + $0xe8] sm:$0xff]
        %v630 = vld [vmem:[#allocation5 + $0xf0] sm:$0xff]
        %v631 = vld [vmem:[#allocation5 + $0xf8] sm:$0xff]
        %v632 = vld [vmem:[#allocation5 + $0x100] sm:$0xff]
        %v633 = vld [vmem:[#allocation5 + $0x108] sm:$0xff]
        %v634 = vld [vmem:[#allocation5 + $0x110] sm:$0xff]
        %v635 = vld [vmem:[#allocation5 + $0x118] sm:$0xff]
        %v636 = vld [vmem:[#allocation5 + $0x120] sm:$0xff]
        %v637 = vld [vmem:[#allocation5 + $0x128] sm:$0xff]
        %v638 = vld [vmem:[#allocation5 + $0x130] sm:$0xff]
        %v639 = vld [vmem:[#allocation5 + $0x138] sm:$0xff]
        %v640 = vld [vmem:[#allocation5 + $0x140] sm:$0xff]
        %v641 = vld [vmem:[#allocation5 + $0x148] sm:$0xff]
        %v642 = vld [vmem:[#allocation5 + $0x150] sm:$0xff]
        %v643 = vld [vmem:[#allocation5 + $0x158] sm:$0xff]
        %v644 = vld [vmem:[#allocation5 + $0x160] sm:$0xff]
        %v645 = vld [vmem:[#allocation5 + $0x168] sm:$0xff]
        %v646 = vld [vmem:[#allocation5 + $0x170] sm:$0xff]
        %v647 = vld [vmem:[#allocation5 + $0x178] sm:$0xff]
        %v648 = vld [vmem:[#allocation5 + $0x180] sm:$0xff]
        %v649 = vld [vmem:[#allocation5 + $0x188] sm:$0xff]
        %v650 = vld [vmem:[#allocation5 + $0x190] sm:$0xff]
        %v651 = vld [vmem:[#allocation5 + $0x198] sm:$0xff]
        %v652 = vld [vmem:[#allocation5 + $0x1a0] sm:$0xff]
        %v653 = vld [vmem:[#allocation5 + $0x1a8] sm:$0xff]
        %v654 = vld [vmem:[#allocation5 + $0x1b0] sm:$0xff]
        %v655 = vld [vmem:[#allocation5 + $0x1b8] sm:$0xff]
        %v656 = vld [vmem:[#allocation5 + $0x1c0] sm:$0xff]
        %v657 = vld [vmem:[#allocation5 + $0x1c8] sm:$0xff]
        %v658 = vld [vmem:[#allocation5 + $0x1d0] sm:$0xff]
        %v659 = vld [vmem:[#allocation5 + $0x1d8] sm:$0xff]
        %v660 = vld [vmem:[#allocation5 + $0x1e0] sm:$0xff]
        %v661 = vld [vmem:[#allocation5 + $0x1e8] sm:$0xff]
        %v662 = vld [vmem:[#allocation5 + $0x1f0] sm:$0xff]
        %v663 = vld [vmem:[#allocation5 + $0x1f8] sm:$0xff]
        %664 = vmatpush.msra.mxu0 %v660
        %665 = vmatpush.msra.mxu0 %v656
        %666 = vmatpush.msra.mxu0 %v652
        %667 = vmatpush.msra.mxu0 %v648
        %668 = vmatpush.msra.mxu0 %v644
        %669 = vmatpush.msra.mxu0 %v640
        %670 = vmatpush.msra.mxu0 %v636
        %671 = vmatpush.msra.mxu0 %v632
        %672 = vmatpush.msra.mxu0 %v628
        %673 = vmatpush.msra.mxu0 %v624
        %674 = vmatpush.msra.mxu0 %v620
        %675 = vmatpush.msra.mxu0 %v616
        %676 = vmatpush.msra.mxu0 %v612
        %677 = vmatpush.msra.mxu0 %v608
        %678 = vmatpush.msra.mxu0 %v604
        %679 = vmatpush.msra.mxu0 %v600
        %680 = vmatmul.f32.gmra.mxu0 %v591
        %v681 = vpop.f32.mrf.mxu0
        %v682 = vadd.f32 0.0, %v681
        %683 = vdwg.mxu0
        %684 = vmatpush.msra.mxu0 %v661
        %685 = vmatpush.msra.mxu0 %v657
        %686 = vmatpush.msra.mxu0 %v653
        %687 = vmatpush.msra.mxu0 %v649
        %688 = vmatpush.msra.mxu0 %v645
        %689 = vmatpush.msra.mxu0 %v641
        %690 = vmatpush.msra.mxu0 %v637
        %691 = vmatpush.msra.mxu0 %v633
        %692 = vmatpush.msra.mxu0 %v629
        %693 = vmatpush.msra.mxu0 %v625
        %694 = vmatpush.msra.mxu0 %v621
        %695 = vmatpush.msra.mxu0 %v617
        %696 = vmatpush.msra.mxu0 %v613
        %697 = vmatpush.msra.mxu0 %v609
        %698 = vmatpush.msra.mxu0 %v605
        %699 = vmatpush.msra.mxu0 %v601
        %700 = vmatmul.f32.gmra.mxu0 %v591
        %v701 = vpop.f32.mrf.mxu0
        %v702 = vadd.f32 0.0, %v701
        %703 = vdwg.mxu0
        %704 = vmatpush.msra.mxu0 %v662
        %705 = vmatpush.msra.mxu0 %v658
        %706 = vmatpush.msra.mxu0 %v654
        %707 = vmatpush.msra.mxu0 %v650
        %708 = vmatpush.msra.mxu0 %v646
        %709 = vmatpush.msra.mxu0 %v642
        %710 = vmatpush.msra.mxu0 %v638
        %711 = vmatpush.msra.mxu0 %v634
        %712 = vmatpush.msra.mxu0 %v630
        %713 = vmatpush.msra.mxu0 %v626
        %714 = vmatpush.msra.mxu0 %v622
        %715 = vmatpush.msra.mxu0 %v618
        %716 = vmatpush.msra.mxu0 %v614
        %717 = vmatpush.msra.mxu0 %v610
        %718 = vmatpush.msra.mxu0 %v606
        %719 = vmatpush.msra.mxu0 %v602
        %720 = vmatmul.f32.gmra.mxu0 %v591
        %v721 = vpop.f32.mrf.mxu0
        %v722 = vadd.f32 0.0, %v721
        %723 = vdwg.mxu0
        %724 = vmatpush.msra.mxu0 %v663
        %725 = vmatpush.msra.mxu0 %v659
        %726 = vmatpush.msra.mxu0 %v655
        %727 = vmatpush.msra.mxu0 %v651
        %728 = vmatpush.msra.mxu0 %v647
        %729 = vmatpush.msra.mxu0 %v643
        %730 = vmatpush.msra.mxu0 %v639
        %731 = vmatpush.msra.mxu0 %v635
        %732 = vmatpush.msra.mxu0 %v631
        %733 = vmatpush.msra.mxu0 %v627
        %734 = vmatpush.msra.mxu0 %v623
        %735 = vmatpush.msra.mxu0 %v619
        %736 = vmatpush.msra.mxu0 %v615
        %737 = vmatpush.msra.mxu0 %v611
        %738 = vmatpush.msra.mxu0 %v607
        %739 = vmatpush.msra.mxu0 %v603
        %740 = vmatmul.f32.gmra.mxu0 %v591
        %v741 = vpop.f32.mrf.mxu0
        %v742 = vadd.f32 0.0, %v741
        %743 = vdwg.mxu0
        %v744 = vadd.f32 %v596, %v682
        %v745 = vadd.f32 %v597, %v702
        %v746 = vadd.f32 %v598, %v722
        %v747 = vadd.f32 %v599, %v742
        %v748 = vmul.f32 %v744, 0.5
        %v749 = vmul.f32 %v745, 0.5
        %v750 = vmul.f32 %v746, 0.5
        %v751 = vtanh.pop %v748
        %v752 = vtanh.pop %v749
        %v753 = vtanh.pop %v750
        %v754 = vmul.f32 %v751, 0.5
        %v755 = vmul.f32 %v752, 0.5
        %v756 = vmul.f32 %v753, 0.5
        %v757 = vadd.f32 %v754, 0.5
        %v758 = vadd.f32 %v755, 0.5
        %v759 = vadd.f32 %v756, 0.5
        %v760 = vtanh.pop %v747
        %v761 = vmul.f32 %v758, %v589
        %v762 = vmul.f32 %v757, %v760
        %v763 = vadd.f32 %v761, %v762
        %v764 = vtanh.pop %v763
        %v765 = vmul.f32 %v759, %v764
        %s766 = scalar_lea.vmem %s232, 8 [#allocation8]
        %767 = vst [vmem:[%s766] sm:$0xff] %v765
        %s768 = smul.u32 2, 4
        %s769 = smul.addr %s768, 8
        %s770 = scalar_lea.vmem [#allocation2], %s769
        %v771 = vld [vmem:[%s770] sm:$0xff]
        %v772 = vld [vmem:[%s770 + $0x8] sm:$0xff]
        %v773 = vld [vmem:[%s770 + $0x10] sm:$0xff]
        %v774 = vld [vmem:[%s770 + $0x18] sm:$0xff]
        %v775 = vld [vmem:[#allocation5] sm:$0xff]
        %v776 = vld [vmem:[#allocation5 + $0x8] sm:$0xff]
        %v777 = vld [vmem:[#allocation5 + $0x10] sm:$0xff]
        %v778 = vld [vmem:[#allocation5 + $0x18] sm:$0xff]
        %v779 = vld [vmem:[#allocation5 + $0x20] sm:$0xff]
        %v780 = vld [vmem:[#allocation5 + $0x28] sm:$0xff]
        %v781 = vld [vmem:[#allocation5 + $0x30] sm:$0xff]
        %v782 = vld [vmem:[#allocation5 + $0x38] sm:$0xff]
        %v783 = vld [vmem:[#allocation5 + $0x40] sm:$0xff]
        %v784 = vld [vmem:[#allocation5 + $0x48] sm:$0xff]
        %v785 = vld [vmem:[#allocation5 + $0x50] sm:$0xff]
        %v786 = vld [vmem:[#allocation5 + $0x58] sm:$0xff]
        %v787 = vld [vmem:[#allocation5 + $0x60] sm:$0xff]
        %v788 = vld [vmem:[#allocation5 + $0x68] sm:$0xff]
        %v789 = vld [vmem:[#allocation5 + $0x70] sm:$0xff]
        %v790 = vld [vmem:[#allocation5 + $0x78] sm:$0xff]
        %v791 = vld [vmem:[#allocation5 + $0x80] sm:$0xff]
        %v792 = vld [vmem:[#allocation5 + $0x88] sm:$0xff]
        %v793 = vld [vmem:[#allocation5 + $0x90] sm:$0xff]
        %v794 = vld [vmem:[#allocation5 + $0x98] sm:$0xff]
        %v795 = vld [vmem:[#allocation5 + $0xa0] sm:$0xff]
        %v796 = vld [vmem:[#allocation5 + $0xa8] sm:$0xff]
        %v797 = vld [vmem:[#allocation5 + $0xb0] sm:$0xff]
        %v798 = vld [vmem:[#allocation5 + $0xb8] sm:$0xff]
        %v799 = vld [vmem:[#allocation5 + $0xc0] sm:$0xff]
        %v800 = vld [vmem:[#allocation5 + $0xc8] sm:$0xff]
        %v801 = vld [vmem:[#allocation5 + $0xd0] sm:$0xff]
        %v802 = vld [vmem:[#allocation5 + $0xd8] sm:$0xff]
        %v803 = vld [vmem:[#allocation5 + $0xe0] sm:$0xff]
        %v804 = vld [vmem:[#allocation5 + $0xe8] sm:$0xff]
        %v805 = vld [vmem:[#allocation5 + $0xf0] sm:$0xff]
        %v806 = vld [vmem:[#allocation5 + $0xf8] sm:$0xff]
        %v807 = vld [vmem:[#allocation5 + $0x100] sm:$0xff]
        %v808 = vld [vmem:[#allocation5 + $0x108] sm:$0xff]
        %v809 = vld [vmem:[#allocation5 + $0x110] sm:$0xff]
        %v810 = vld [vmem:[#allocation5 + $0x118] sm:$0xff]
        %v811 = vld [vmem:[#allocation5 + $0x120] sm:$0xff]
        %v812 = vld [vmem:[#allocation5 + $0x128] sm:$0xff]
        %v813 = vld [vmem:[#allocation5 + $0x130] sm:$0xff]
        %v814 = vld [vmem:[#allocation5 + $0x138] sm:$0xff]
        %v815 = vld [vmem:[#allocation5 + $0x140] sm:$0xff]
        %v816 = vld [vmem:[#allocation5 + $0x148] sm:$0xff]
        %v817 = vld [vmem:[#allocation5 + $0x150] sm:$0xff]
        %v818 = vld [vmem:[#allocation5 + $0x158] sm:$0xff]
        %v819 = vld [vmem:[#allocation5 + $0x160] sm:$0xff]
        %v820 = vld [vmem:[#allocation5 + $0x168] sm:$0xff]
        %v821 = vld [vmem:[#allocation5 + $0x170] sm:$0xff]
        %v822 = vld [vmem:[#allocation5 + $0x178] sm:$0xff]
        %v823 = vld [vmem:[#allocation5 + $0x180] sm:$0xff]
        %v824 = vld [vmem:[#allocation5 + $0x188] sm:$0xff]
        %v825 = vld [vmem:[#allocation5 + $0x190] sm:$0xff]
        %v826 = vld [vmem:[#allocation5 + $0x198] sm:$0xff]
        %v827 = vld [vmem:[#allocation5 + $0x1a0] sm:$0xff]
        %v828 = vld [vmem:[#allocation5 + $0x1a8] sm:$0xff]
        %v829 = vld [vmem:[#allocation5 + $0x1b0] sm:$0xff]
        %v830 = vld [vmem:[#allocation5 + $0x1b8] sm:$0xff]
        %v831 = vld [vmem:[#allocation5 + $0x1c0] sm:$0xff]
        %v832 = vld [vmem:[#allocation5 + $0x1c8] sm:$0xff]
        %v833 = vld [vmem:[#allocation5 + $0x1d0] sm:$0xff]
        %v834 = vld [vmem:[#allocation5 + $0x1d8] sm:$0xff]
        %v835 = vld [vmem:[#allocation5 + $0x1e0] sm:$0xff]
        %v836 = vld [vmem:[#allocation5 + $0x1e8] sm:$0xff]
        %v837 = vld [vmem:[#allocation5 + $0x1f0] sm:$0xff]
        %v838 = vld [vmem:[#allocation5 + $0x1f8] sm:$0xff]
        %839 = vmatpush.msra.mxu0 %v835
        %840 = vmatpush.msra.mxu0 %v831
        %841 = vmatpush.msra.mxu0 %v827
        %842 = vmatpush.msra.mxu0 %v823
        %843 = vmatpush.msra.mxu0 %v819
        %844 = vmatpush.msra.mxu0 %v815
        %845 = vmatpush.msra.mxu0 %v811
        %846 = vmatpush.msra.mxu0 %v807
        %847 = vmatpush.msra.mxu0 %v803
        %848 = vmatpush.msra.mxu0 %v799
        %849 = vmatpush.msra.mxu0 %v795
        %850 = vmatpush.msra.mxu0 %v791
        %851 = vmatpush.msra.mxu0 %v787
        %852 = vmatpush.msra.mxu0 %v783
        %853 = vmatpush.msra.mxu0 %v779
        %854 = vmatpush.msra.mxu0 %v775
        %855 = vmatmul.f32.gmra.mxu0 %v765
        %v856 = vpop.f32.mrf.mxu0
        %v857 = vadd.f32 0.0, %v856
        %858 = vdwg.mxu0
        %859 = vmatpush.msra.mxu0 %v836
        %860 = vmatpush.msra.mxu0 %v832
        %861 = vmatpush.msra.mxu0 %v828
        %862 = vmatpush.msra.mxu0 %v824
        %863 = vmatpush.msra.mxu0 %v820
        %864 = vmatpush.msra.mxu0 %v816
        %865 = vmatpush.msra.mxu0 %v812
        %866 = vmatpush.msra.mxu0 %v808
        %867 = vmatpush.msra.mxu0 %v804
        %868 = vmatpush.msra.mxu0 %v800
        %869 = vmatpush.msra.mxu0 %v796
        %870 = vmatpush.msra.mxu0 %v792
        %871 = vmatpush.msra.mxu0 %v788
        %872 = vmatpush.msra.mxu0 %v784
        %873 = vmatpush.msra.mxu0 %v780
        %874 = vmatpush.msra.mxu0 %v776
        %875 = vmatmul.f32.gmra.mxu0 %v765
        %v876 = vpop.f32.mrf.mxu0
        %v877 = vadd.f32 0.0, %v876
        %878 = vdwg.mxu0
        %879 = vmatpush.msra.mxu0 %v837
        %880 = vmatpush.msra.mxu0 %v833
        %881 = vmatpush.msra.mxu0 %v829
        %882 = vmatpush.msra.mxu0 %v825
        %883 = vmatpush.msra.mxu0 %v821
        %884 = vmatpush.msra.mxu0 %v817
        %885 = vmatpush.msra.mxu0 %v813
        %886 = vmatpush.msra.mxu0 %v809
        %887 = vmatpush.msra.mxu0 %v805
        %888 = vmatpush.msra.mxu0 %v801
        %889 = vmatpush.msra.mxu0 %v797
        %890 = vmatpush.msra.mxu0 %v793
        %891 = vmatpush.msra.mxu0 %v789
        %892 = vmatpush.msra.mxu0 %v785
        %893 = vmatpush.msra.mxu0 %v781
        %894 = vmatpush.msra.mxu0 %v777
        %895 = vmatmul.f32.gmra.mxu0 %v765
        %v896 = vpop.f32.mrf.mxu0
        %v897 = vadd.f32 0.0, %v896
        %898 = vdwg.mxu0
        %899 = vmatpush.msra.mxu0 %v838
        %900 = vmatpush.msra.mxu0 %v834
        %901 = vmatpush.msra.mxu0 %v830
        %902 = vmatpush.msra.mxu0 %v826
        %903 = vmatpush.msra.mxu0 %v822
        %904 = vmatpush.msra.mxu0 %v818
        %905 = vmatpush.msra.mxu0 %v814
        %906 = vmatpush.msra.mxu0 %v810
        %907 = vmatpush.msra.mxu0 %v806
        %908 = vmatpush.msra.mxu0 %v802
        %909 = vmatpush.msra.mxu0 %v798
        %910 = vmatpush.msra.mxu0 %v794
        %911 = vmatpush.msra.mxu0 %v790
        %912 = vmatpush.msra.mxu0 %v786
        %913 = vmatpush.msra.mxu0 %v782
        %914 = vmatpush.msra.mxu0 %v778
        %915 = vmatmul.f32.gmra.mxu0 %v765
        %v916 = vpop.f32.mrf.mxu0
        %v917 = vadd.f32 0.0, %v916
        %918 = vdwg.mxu0
        %v919 = vadd.f32 %v771, %v857
        %v920 = vadd.f32 %v772, %v877
        %v921 = vadd.f32 %v773, %v897
        %v922 = vadd.f32 %v774, %v917
        %v923 = vmul.f32 %v919, 0.5
        %v924 = vmul.f32 %v920, 0.5
        %v925 = vmul.f32 %v921, 0.5
        %v926 = vtanh.pop %v923
        %v927 = vtanh.pop %v924
        %v928 = vtanh.pop %v925
        %v929 = vmul.f32 %v926, 0.5
        %v930 = vmul.f32 %v927, 0.5
        %v931 = vmul.f32 %v928, 0.5
        %v932 = vadd.f32 %v929, 0.5
        %v933 = vadd.f32 %v930, 0.5
        %v934 = vadd.f32 %v931, 0.5
        %v935 = vtanh.pop %v922
        %v936 = vmul.f32 %v933, %v763
        %v937 = vmul.f32 %v932, %v935
        %v938 = vadd.f32 %v936, %v937
        %v939 = vtanh.pop %v938
        %v940 = vmul.f32 %v934, %v939
        %s941 = scalar_lea.vmem %s232, 16 [#allocation8]
        %942 = vst [vmem:[%s941] sm:$0xff] %v940
        %s943 = smul.u32 3, 4
        %s944 = smul.addr %s943, 8
        %s945 = scalar_lea.vmem [#allocation2], %s944
        %v946 = vld [vmem:[%s945] sm:$0xff]
        %v947 = vld [vmem:[%s945 + $0x8] sm:$0xff]
        %v948 = vld [vmem:[%s945 + $0x10] sm:$0xff]
        %v949 = vld [vmem:[%s945 + $0x18] sm:$0xff]
        %v950 = vld [vmem:[#allocation5] sm:$0xff]
        %v951 = vld [vmem:[#allocation5 + $0x8] sm:$0xff]
        %v952 = vld [vmem:[#allocation5 + $0x10] sm:$0xff]
        %v953 = vld [vmem:[#allocation5 + $0x18] sm:$0xff]
        %v954 = vld [vmem:[#allocation5 + $0x20] sm:$0xff]
        %v955 = vld [vmem:[#allocation5 + $0x28] sm:$0xff]
        %v956 = vld [vmem:[#allocation5 + $0x30] sm:$0xff]
        %v957 = vld [vmem:[#allocation5 + $0x38] sm:$0xff]
        %v958 = vld [vmem:[#allocation5 + $0x40] sm:$0xff]
        %v959 = vld [vmem:[#allocation5 + $0x48] sm:$0xff]
        %v960 = vld [vmem:[#allocation5 + $0x50] sm:$0xff]
        %v961 = vld [vmem:[#allocation5 + $0x58] sm:$0xff]
        %v962 = vld [vmem:[#allocation5 + $0x60] sm:$0xff]
        %v963 = vld [vmem:[#allocation5 + $0x68] sm:$0xff]
        %v964 = vld [vmem:[#allocation5 + $0x70] sm:$0xff]
        %v965 = vld [vmem:[#allocation5 + $0x78] sm:$0xff]
        %v966 = vld [vmem:[#allocation5 + $0x80] sm:$0xff]
        %v967 = vld [vmem:[#allocation5 + $0x88] sm:$0xff]
        %v968 = vld [vmem:[#allocation5 + $0x90] sm:$0xff]
        %v969 = vld [vmem:[#allocation5 + $0x98] sm:$0xff]
        %v970 = vld [vmem:[#allocation5 + $0xa0] sm:$0xff]
        %v971 = vld [vmem:[#allocation5 + $0xa8] sm:$0xff]
        %v972 = vld [vmem:[#allocation5 + $0xb0] sm:$0xff]
        %v973 = vld [vmem:[#allocation5 + $0xb8] sm:$0xff]
        %v974 = vld [vmem:[#allocation5 + $0xc0] sm:$0xff]
        %v975 = vld [vmem:[#allocation5 + $0xc8] sm:$0xff]
        %v976 = vld [vmem:[#allocation5 + $0xd0] sm:$0xff]
        %v977 = vld [vmem:[#allocation5 + $0xd8] sm:$0xff]
        %v978 = vld [vmem:[#allocation5 + $0xe0] sm:$0xff]
        %v979 = vld [vmem:[#allocation5 + $0xe8] sm:$0xff]
        %v980 = vld [vmem:[#allocation5 + $0xf0] sm:$0xff]
        %v981 = vld [vmem:[#allocation5 + $0xf8] sm:$0xff]
        %v982 = vld [vmem:[#allocation5 + $0x100] sm:$0xff]
        %v983 = vld [vmem:[#allocation5 + $0x108] sm:$0xff]
        %v984 = vld [vmem:[#allocation5 + $0x110] sm:$0xff]
        %v985 = vld [vmem:[#allocation5 + $0x118] sm:$0xff]
        %v986 = vld [vmem:[#allocation5 + $0x120] sm:$0xff]
        %v987 = vld [vmem:[#allocation5 + $0x128] sm:$0xff]
        %v988 = vld [vmem:[#allocation5 + $0x130] sm:$0xff]
        %v989 = vld [vmem:[#allocation5 + $0x138] sm:$0xff]
        %v990 = vld [vmem:[#allocation5 + $0x140] sm:$0xff]
        %v991 = vld [vmem:[#allocation5 + $0x148] sm:$0xff]
        %v992 = vld [vmem:[#allocation5 + $0x150] sm:$0xff]
        %v993 = vld [vmem:[#allocation5 + $0x158] sm:$0xff]
        %v994 = vld [vmem:[#allocation5 + $0x160] sm:$0xff]
        %v995 = vld [vmem:[#allocation5 + $0x168] sm:$0xff]
        %v996 = vld [vmem:[#allocation5 + $0x170] sm:$0xff]
        %v997 = vld [vmem:[#allocation5 + $0x178] sm:$0xff]
        %v998 = vld [vmem:[#allocation5 + $0x180] sm:$0xff]
        %v999 = vld [vmem:[#allocation5 + $0x188] sm:$0xff]
        %v1000 = vld [vmem:[#allocation5 + $0x190] sm:$0xff]
        %v1001 = vld [vmem:[#allocation5 + $0x198] sm:$0xff]
        %v1002 = vld [vmem:[#allocation5 + $0x1a0] sm:$0xff]
        %v1003 = vld [vmem:[#allocation5 + $0x1a8] sm:$0xff]
        %v1004 = vld [vmem:[#allocation5 + $0x1b0] sm:$0xff]
        %v1005 = vld [vmem:[#allocation5 + $0x1b8] sm:$0xff]
        %v1006 = vld [vmem:[#allocation5 + $0x1c0] sm:$0xff]
        %v1007 = vld [vmem:[#allocation5 + $0x1c8] sm:$0xff]
        %v1008 = vld [vmem:[#allocation5 + $0x1d0] sm:$0xff]
        %v1009 = vld [vmem:[#allocation5 + $0x1d8] sm:$0xff]
        %v1010 = vld [vmem:[#allocation5 + $0x1e0] sm:$0xff]
        %v1011 = vld [vmem:[#allocation5 + $0x1e8] sm:$0xff]
        %v1012 = vld [vmem:[#allocation5 + $0x1f0] sm:$0xff]
        %v1013 = vld [vmem:[#allocation5 + $0x1f8] sm:$0xff]
        %1014 = vmatpush.msra.mxu0 %v1010
        %1015 = vmatpush.msra.mxu0 %v1006
        %1016 = vmatpush.msra.mxu0 %v1002
        %1017 = vmatpush.msra.mxu0 %v998
        %1018 = vmatpush.msra.mxu0 %v994
        %1019 = vmatpush.msra.mxu0 %v990
        %1020 = vmatpush.msra.mxu0 %v986
        %1021 = vmatpush.msra.mxu0 %v982
        %1022 = vmatpush.msra.mxu0 %v978
        %1023 = vmatpush.msra.mxu0 %v974
        %1024 = vmatpush.msra.mxu0 %v970
        %1025 = vmatpush.msra.mxu0 %v966
        %1026 = vmatpush.msra.mxu0 %v962
        %1027 = vmatpush.msra.mxu0 %v958
        %1028 = vmatpush.msra.mxu0 %v954
        %1029 = vmatpush.msra.mxu0 %v950
        %1030 = vmatmul.f32.gmra.mxu0 %v940
        %v1031 = vpop.f32.mrf.mxu0
        %v1032 = vadd.f32 0.0, %v1031
        %1033 = vdwg.mxu0
        %1034 = vmatpush.msra.mxu0 %v1011
        %1035 = vmatpush.msra.mxu0 %v1007
        %1036 = vmatpush.msra.mxu0 %v1003
        %1037 = vmatpush.msra.mxu0 %v999
        %1038 = vmatpush.msra.mxu0 %v995
        %1039 = vmatpush.msra.mxu0 %v991
        %1040 = vmatpush.msra.mxu0 %v987
        %1041 = vmatpush.msra.mxu0 %v983
        %1042 = vmatpush.msra.mxu0 %v979
        %1043 = vmatpush.msra.mxu0 %v975
        %1044 = vmatpush.msra.mxu0 %v971
        %1045 = vmatpush.msra.mxu0 %v967
        %1046 = vmatpush.msra.mxu0 %v963
        %1047 = vmatpush.msra.mxu0 %v959
        %1048 = vmatpush.msra.mxu0 %v955
        %1049 = vmatpush.msra.mxu0 %v951
        %1050 = vmatmul.f32.gmra.mxu0 %v940
        %v1051 = vpop.f32.mrf.mxu0
        %v1052 = vadd.f32 0.0, %v1051
        %1053 = vdwg.mxu0
        %1054 = vmatpush.msra.mxu0 %v1012
        %1055 = vmatpush.msra.mxu0 %v1008
        %1056 = vmatpush.msra.mxu0 %v1004
        %1057 = vmatpush.msra.mxu0 %v1000
        %1058 = vmatpush.msra.mxu0 %v996
        %1059 = vmatpush.msra.mxu0 %v992
        %1060 = vmatpush.msra.mxu0 %v988
        %1061 = vmatpush.msra.mxu0 %v984
        %1062 = vmatpush.msra.mxu0 %v980
        %1063 = vmatpush.msra.mxu0 %v976
        %1064 = vmatpush.msra.mxu0 %v972
        %1065 = vmatpush.msra.mxu0 %v968
        %1066 = vmatpush.msra.mxu0 %v964
        %1067 = vmatpush.msra.mxu0 %v960
        %1068 = vmatpush.msra.mxu0 %v956
        %1069 = vmatpush.msra.mxu0 %v952
        %1070 = vmatmul.f32.gmra.mxu0 %v940
        %v1071 = vpop.f32.mrf.mxu0
        %v1072 = vadd.f32 0.0, %v1071
        %1073 = vdwg.mxu0
        %1074 = vmatpush.msra.mxu0 %v1013
        %1075 = vmatpush.msra.mxu0 %v1009
        %1076 = vmatpush.msra.mxu0 %v1005
        %1077 = vmatpush.msra.mxu0 %v1001
        %1078 = vmatpush.msra.mxu0 %v997
        %1079 = vmatpush.msra.mxu0 %v993
        %1080 = vmatpush.msra.mxu0 %v989
        %1081 = vmatpush.msra.mxu0 %v985
        %1082 = vmatpush.msra.mxu0 %v981
        %1083 = vmatpush.msra.mxu0 %v977
        %1084 = vmatpush.msra.mxu0 %v973
        %1085 = vmatpush.msra.mxu0 %v969
        %1086 = vmatpush.msra.mxu0 %v965
        %1087 = vmatpush.msra.mxu0 %v961
        %1088 = vmatpush.msra.mxu0 %v957
        %1089 = vmatpush.msra.mxu0 %v953
        %1090 = vmatmul.f32.gmra.mxu0 %v940
        %v1091 = vpop.f32.mrf.mxu0
        %v1092 = vadd.f32 0.0, %v1091
        %1093 = vdwg.mxu0
        %v1094 = vadd.f32 %v946, %v1032
        %v1095 = vadd.f32 %v947, %v1052
        %v1096 = vadd.f32 %v948, %v1072
        %v1097 = vadd.f32 %v949, %v1092
        %v1098 = vmul.f32 %v1094, 0.5
        %v1099 = vmul.f32 %v1095, 0.5
        %v1100 = vmul.f32 %v1096, 0.5
        %v1101 = vtanh.pop %v1098
        %v1102 = vtanh.pop %v1099
        %v1103 = vtanh.pop %v1100
        %v1104 = vmul.f32 %v1101, 0.5
        %v1105 = vmul.f32 %v1102, 0.5
        %v1106 = vmul.f32 %v1103, 0.5
        %v1107 = vadd.f32 %v1104, 0.5
        %v1108 = vadd.f32 %v1105, 0.5
        %v1109 = vadd.f32 %v1106, 0.5
        %v1110 = vtanh.pop %v1097
        %v1111 = vmul.f32 %v1108, %v938
        %v1112 = vmul.f32 %v1107, %v1110
        %v1113 = vadd.f32 %v1111, %v1112
        %v1114 = vtanh.pop %v1113
        %v1115 = vmul.f32 %v1109, %v1114
        %s1116 = scalar_lea.vmem %s232, 24 [#allocation8]
        %1117 = vst [vmem:[%s1116] sm:$0xff] %v1115
        %1118 = vst [vmem:[#allocation3] sm:$0xff] %v1115
        %1119 = vst [vmem:[#allocation4] sm:$0xff] %v1113
        %s1120 = sand.u32 %s132, 1
        %s1121 = scalar_lea.sflag [#allocation7], %s1120
        %s1122 = sand.u32 %s132, 1
        %s1123 = smul.addr %s1122, 32
        %s1124 = scalar_lea.vmem [#allocation8], %s1123
        // Predicated region
        $region45: #{tpu_custom_call.1} parent=35 // pred_check
          %p1125 = pneg %p142
        $region46: #{tpu_custom_call.1} parent=35 // pred_check_branch
          %1127 = sbr.rel (%p1125) target = $region48
        $region47: #{tpu_custom_call.1} parent=35 // pred_region
          %s1128 = smul.u32 4, %s24
          %1130 = vsyncadd %s1121, 0
          %s1131 = smul.addr %s23, 8
          %s1132 = sadd.s32 %s1128, %s1131
          %s1133 = smul.addr %s1132, 8
          %s1134 = scalar_lea.hbm %s4, %s1133
          %s1135 = sshll.u32 %s1124, 4
          %s1136 = int_to_ptr.vmem [resolvable:$true] %s1135
          %s1137 = sshll.u32 %s1134, 4
          %s1138 = int_to_ptr.hbm [resolvable:$true] %s1137
          %1143 = dma.vmem_to_hbm [thread:$0]  %s1136, 512, %s1138, %s1121, 128, 128, 8
        $region48: #{tpu_custom_call.1} parent=35 // pred_fallthru
          _
      $region36: #{tpu_custom_call.1} parent=5 // pred_fallthru
        _
      %p1144 = scmp.le.s32.totalorder 2, %s14
      // Predicated region
      $region49: #{tpu_custom_call.1} parent=5 // pred_check
        %p1145 = pneg %p1144
      $region50: #{tpu_custom_call.1} parent=5 // pred_check_branch
        %1147 = sbr.rel (%p1145) target = $region52
      $region51: #{tpu_custom_call.1} parent=5 // pred_region
        %s1148 = ssub.s32 %s14, 2
        // Predicated region
        $region53: #{tpu_custom_call.1} parent=51 // pred_check
          %p1149 = pneg %p148
        $region54: #{tpu_custom_call.1} parent=51 // pred_check_branch
          %1151 = sbr.rel (%p1149) target = $region56
        $region55: #{tpu_custom_call.1} parent=51 // pred_region
          %s1152 = sand.u32 %s133, 1
          %s1153 = scalar_lea.sflag [#allocation7], %s1152
          %s1154 = sand.u32 %s133, 1
          %s1155 = smul.addr %s1154, 32
          %s1156 = scalar_lea.vmem [#allocation8], %s1155
          %1158 = dma.done %s1153, 512
        $region56: #{tpu_custom_call.1} parent=51 // pred_fallthru
          _
      $region52: #{tpu_custom_call.1} parent=5 // pred_fallthru
        _
    $region6: #{tpu_custom_call.1} parent=1 // loop_footer
      %s18 = sadd.s32 1, %s14
    $region7: #{tpu_custom_call.1} parent=1 // loop_footer_branch
      %13 = sbr.rel target = $region3
    $region8: #{tpu_custom_call.1} parent=1 // loop_exit
      _
    %1159 = vsyncpa [#allocation6], 1
    %s1160 = scalar_lea.sflag [#allocation6], 1
    %1161 = vsyncpa %s1160, 1
    %1162 = vsyncpa [#allocation7], 1
    %s1163 = scalar_lea.sflag [#allocation7], 1
    %1164 = vsyncpa %s1163, 1

</llo_original>
